<compile_context>
chip_gen: v7x
topology: tpu7x:2x2x1
jax: 0.10.0
libtpu: 0.0.40
codegen_flags: <defaults>
</compile_context>

<pallas_src>
import functools

import jax
import jax.numpy as jnp
from jax.experimental import pallas as pl
from jax.experimental.pallas import tpu as pltpu


_LANE = 128


def _round_up(n, m):
    return (n + m - 1) // m * m


def _mlp_softmax_kernel(x_ref, w1_ref, w2_ref, w3_ref, b_ref, o_ref, *, group_size):
    """One grid step processes `tile_rows` rows = (tile_rows // group_size)
    independent softmax groups through the 3-layer MLP, then applies a
    per-group softmax over the row axis (== F.softmax(..., dim=0) per problem).
    """
    h1p = w1_ref.shape[1]      # padded hidden1 width (multiple of 128)
    h2p = w2_ref.shape[1]      # padded hidden2 width (multiple of 128)
    n_out_p = w3_ref.shape[1]  # padded output width (multiple of 128)

    x = x_ref[...]

    # Packed biases; every slice below is a full multiple-of-128 lane width.
    b1 = b_ref[0:1, :h1p]
    b2 = b_ref[1:2, :h2p]
    b3 = b_ref[2:3, :n_out_p]

    # fc1 + ReLU
    h1 = jnp.maximum(
        jnp.dot(x, w1_ref[...], preferred_element_type=jnp.float32) + b1, 0.0)
    # fc2 + ReLU
    h2 = jnp.maximum(
        jnp.dot(h1, w2_ref[...], preferred_element_type=jnp.float32) + b2, 0.0)
    # fc3
    logits = jnp.dot(h2, w3_ref[...], preferred_element_type=jnp.float32) + b3

    # Per-group softmax over the row (batch) axis.  group_size == B, and with
    # B == 8 each group maps exactly onto one (8, 128) vreg tile, so the
    # reshape is a pure re-grouping of sublanes (no lane movement).
    rows = logits.shape[0]
    groups = rows // group_size
    lg = logits.reshape(groups, group_size, n_out_p)
    m = jnp.max(lg, axis=1, keepdims=True)
    e = jnp.exp(lg - m)
    s = jnp.sum(e, axis=1, keepdims=True)
    # Exact reciprocal: approx=True (the single EUP vrcp form) has ~1e-4 rel
    # error and would violate the 1e-5 tolerance.
    probs = e * pl.reciprocal(s, approx=False)
    o_ref[...] = probs.reshape(rows, n_out_p).astype(o_ref.dtype)


def _pick_groups_per_tile(num_groups, group_size, target_rows=256):
    """Largest divisor of num_groups whose row count stays <= target_rows."""
    gpt = max(1, min(num_groups, target_rows // max(group_size, 1)))
    while num_groups % gpt:
        gpt -= 1
    return gpt


def net_forward_batched(x, params, *, n_output):
    """x: (G, B, n_feature) float32 -> (G, B, n_output).

    Runs G independent Net.forward problems in a single gridded pallas_call.
    Each problem gets its own softmax over its B rows (dim=0), exactly like
    calling the PyTorch module on each (B, n_feature) slice.
    """
    w1, w2, w3, b_packed = params["w1"], params["w2"], params["w3"], params["b_packed"]
    G, B, n_feature = x.shape
    n_out_p = w3.shape[1]

    gpt = _pick_groups_per_tile(G, B)          # softmax groups per grid step
    tile_rows = gpt * B                        # MXU M-dim per grid step
    rows = G * B
    grid = (rows // tile_rows,)

    x2 = x.reshape(rows, n_feature)            # contiguous, free reshape

    # Constant index_map: weights/biases stay VMEM-resident across grid steps.
    const = lambda shape: pl.BlockSpec(shape, lambda i: (0, 0))

    out = pl.pallas_call(
        functools.partial(_mlp_softmax_kernel, group_size=B),
        out_shape=jax.ShapeDtypeStruct((rows, n_out_p), jnp.float32),
        grid=grid,
        in_specs=[
            pl.BlockSpec((tile_rows, n_feature), lambda i: (i, 0)),
            const(w1.shape),
            const(w2.shape),
            const(w3.shape),
            const(b_packed.shape),
        ],
        out_specs=pl.BlockSpec((tile_rows, n_out_p), lambda i: (i, 0)),
        compiler_params=pltpu.CompilerParams(
            # Row tiles are independent -> shard across v7x's 2 TensorCores.
            dimension_semantics=("parallel",)),
    )(x2, w1, w2, w3, b_packed)

    # Drop the zero-padded softmax columns (they hold the constant 1/B).
    return out.reshape(G, B, n_out_p)[..., :n_output]


def net_forward(x, params, *, n_output):
    """Single-problem forward, matching Net.forward: (B, n_feature) -> (B, n_output)."""
    return net_forward_batched(x[None], params, n_output=n_output)[0]


def init_params(key, n_feature, n_hidden1, n_hidden2, n_output):
    """Deterministic init mimicking torch.nn.Linear's U(-1/sqrt(fan_in), ...).

    Returns (kernel_params, ref_params):
      kernel_params: weights in kernel layout (in, out), zero-padded so every
        layer output width is a multiple of 128 lanes, plus the three biases
        packed into one lane-dense (3, 128k) array.  All layout work happens
        once here; net_forward does zero per-call glue.
      ref_params: the unpadded weights/biases for the pure-JAX reference.
    """
    ks = jax.random.split(key, 6)

    def linear(kw, kb, fan_in, fan_out):
        bound = 1.0 / jnp.sqrt(fan_in)
        # Sample in PyTorch's (out, in) orientation for bit-compat with the
        # original init, then transpose ONCE here (init-time, not per call).
        w = jax.random.uniform(kw, (fan_out, fan_in), jnp.float32, -bound, bound)
        b = jax.random.uniform(kb, (fan_out,), jnp.float32, -bound, bound)
        return w.T, b  # (in, out), (out,)

    w1, b1 = linear(ks[0], ks[1], n_feature, n_hidden1)
    w2, b2 = linear(ks[2], ks[3], n_hidden1, n_hidden2)
    w3, b3 = linear(ks[4], ks[5], n_hidden2, n_output)

    h1p = _round_up(n_hidden1, _LANE)
    h2p = _round_up(n_hidden2, _LANE)
    nop = _round_up(n_output, _LANE)

    # Zero padding is mathematically inert: padded hidden units stay exactly 0
    # through relu, padded logit columns stay exactly 0 and are sliced off.
    w1p = jnp.zeros((n_feature, h1p), jnp.float32).at[:, :n_hidden1].set(w1)
    w2p = jnp.zeros((h1p, h2p), jnp.float32).at[:n_hidden1, :n_hidden2].set(w2)
    w3p = jnp.zeros((h2p, nop), jnp.float32).at[:n_hidden2, :n_output].set(w3)

    bmax = max(h1p, h2p, nop)
    pad = lambda b: jnp.pad(b, (0, bmax - b.shape[0]))
    b_packed = jnp.stack([pad(b1), pad(b2), pad(b3)], axis=0)  # (3, bmax)

    kernel_params = {"w1": w1p, "w2": w2p, "w3": w3p, "b_packed": b_packed}
    ref_params = {"w1": w1, "w2": w2, "w3": w3, "b1": b1, "b2": b2, "b3": b3}
    return kernel_params, ref_params


def net_forward_ref(x, p):
    """Pure-JAX reference (unpadded weights, (in, out) layout)."""
    h1 = jnp.maximum(x @ p["w1"] + p["b1"], 0.0)
    h2 = jnp.maximum(h1 @ p["w2"] + p["b2"], 0.0)
    logits = h2 @ p["w3"] + p["b3"]
    return jax.nn.softmax(logits, axis=0)


if __name__ == "__main__":
    B, n_feature, n_hidden1, n_hidden2, n_output = 8, 32, 64, 64, 16
    G = 64  # independent forward passes fused into one launch

    key = jax.random.PRNGKey(0)
    kx, kp = jax.random.split(key)
    xs = jax.random.normal(kx, (G, B, n_feature), jnp.float32)
    kparams, rparams = init_params(kp, n_feature, n_hidden1, n_hidden2, n_output)

    # Batched path: one gridded pallas_call for all G problems.
    fwd_batched = jax.jit(functools.partial(net_forward_batched, n_output=n_output))
    out = jax.block_until_ready(fwd_batched(xs, kparams))

    ref = jax.vmap(lambda xi: net_forward_ref(xi, rparams))(xs)
    assert out.shape == (G, B, n_output)
    assert jnp.allclose(out, ref, atol=1e-5, rtol=1e-5), "batched mismatch vs reference"
    # softmax over dim=0 of each problem => per-problem columns sum to 1
    assert jnp.allclose(jnp.sum(out, axis=1), jnp.ones((G, n_output)), atol=1e-5)

    # Single-problem path (exactly the original Net.forward signature).
    fwd_single = jax.jit(functools.partial(net_forward, n_output=n_output))
    out1 = jax.block_until_ready(fwd_single(xs[0], kparams))
    assert out1.shape == (B, n_output)
    assert jnp.allclose(out1, net_forward_ref(xs[0], rparams), atol=1e-5, rtol=1e-5)

    print("KERNEL_OK")
</pallas_src>

<mosaic_0001>
module attributes {stable_mosaic.version = 11 : i64} {
  func.func @_mlp_softmax_kernel(%arg0: i32, %arg1: memref<256x32xf32, #tpu.memory_space<vmem>>, %arg2: memref<32x128xf32, #tpu.memory_space<vmem>>, %arg3: memref<128x128xf32, #tpu.memory_space<vmem>>, %arg4: memref<128x128xf32, #tpu.memory_space<vmem>>, %arg5: memref<3x128xf32, #tpu.memory_space<vmem>>, %arg6: memref<256x128xf32, #tpu.memory_space<vmem>>) attributes {dimension_semantics = [#tpu.dimension_semantics<parallel>], iteration_bounds = array<i64: 2>, scalar_prefetch = 0 : i64, scratch_operands = 0 : i64, tpu.core_type = #tpu.core_type<tc>, window_params = [{transform_indices = @transform_0, window_bounds = array<i64: 256, 32>}, {pipeline_mode = #tpu.pipeline_mode<synchronous>, transform_indices = @transform_1, window_bounds = array<i64: 32, 128>}, {pipeline_mode = #tpu.pipeline_mode<synchronous>, transform_indices = @transform_2, window_bounds = array<i64: 128, 128>}, {pipeline_mode = #tpu.pipeline_mode<synchronous>, transform_indices = @transform_3, window_bounds = array<i64: 128, 128>}, {pipeline_mode = #tpu.pipeline_mode<synchronous>, transform_indices = @transform_4, window_bounds = array<i64: 3, 128>}, {transform_indices = @transform_5, window_bounds = array<i64: 256, 128>}]} {
    %c0 = arith.constant 0 : index
    %c0_0 = arith.constant 0 : index
    %0 = vector.load %arg1[%c0, %c0_0] : memref<256x32xf32, #tpu.memory_space<vmem>>, vector<256x32xf32>
    %c0_1 = arith.constant 0 : index
    %c0_2 = arith.constant 0 : index
    %1 = vector.load %arg5[%c0_1, %c0_2] : memref<3x128xf32, #tpu.memory_space<vmem>>, vector<1x128xf32>
    %c1 = arith.constant 1 : index
    %c0_3 = arith.constant 0 : index
    %2 = vector.load %arg5[%c1, %c0_3] : memref<3x128xf32, #tpu.memory_space<vmem>>, vector<1x128xf32>
    %c2 = arith.constant 2 : index
    %c0_4 = arith.constant 0 : index
    %3 = vector.load %arg5[%c2, %c0_4] : memref<3x128xf32, #tpu.memory_space<vmem>>, vector<1x128xf32>
    %c0_5 = arith.constant 0 : index
    %c0_6 = arith.constant 0 : index
    %4 = vector.load %arg2[%c0_5, %c0_6] : memref<32x128xf32, #tpu.memory_space<vmem>>, vector<32x128xf32>
    %cst = arith.constant dense<0.000000e+00> : vector<256x128xf32>
    %5 = tpu.matmul %0, %4, %cst {dimension_numbers = #tpu.dot_dimension_numbers<[1], [0], [0], [1], [0, 0, 1, 1], [], []>} : vector<256x32xf32>, vector<32x128xf32>, vector<256x128xf32> -> vector<256x128xf32>
    %6 = vector.broadcast %1 : vector<1x128xf32> to vector<256x128xf32>
    %7 = arith.addf %5, %6 : vector<256x128xf32>
    %cst_7 = arith.constant 0.000000e+00 : f32
    %8 = vector.broadcast %cst_7 : f32 to vector<256x128xf32>
    %9 = arith.maximumf %7, %8 : vector<256x128xf32>
    %c0_8 = arith.constant 0 : index
    %c0_9 = arith.constant 0 : index
    %10 = vector.load %arg3[%c0_8, %c0_9] : memref<128x128xf32, #tpu.memory_space<vmem>>, vector<128x128xf32>
    %cst_10 = arith.constant dense<0.000000e+00> : vector<256x128xf32>
    %11 = tpu.matmul %9, %10, %cst_10 {dimension_numbers = #tpu.dot_dimension_numbers<[1], [0], [0], [1], [0, 0, 1, 1], [], []>} : vector<256x128xf32>, vector<128x128xf32>, vector<256x128xf32> -> vector<256x128xf32>
    %12 = vector.broadcast %2 : vector<1x128xf32> to vector<256x128xf32>
    %13 = arith.addf %11, %12 : vector<256x128xf32>
    %cst_11 = arith.constant 0.000000e+00 : f32
    %14 = vector.broadcast %cst_11 : f32 to vector<256x128xf32>
    %15 = arith.maximumf %13, %14 : vector<256x128xf32>
    %c0_12 = arith.constant 0 : index
    %c0_13 = arith.constant 0 : index
    %16 = vector.load %arg4[%c0_12, %c0_13] : memref<128x128xf32, #tpu.memory_space<vmem>>, vector<128x128xf32>
    %cst_14 = arith.constant dense<0.000000e+00> : vector<256x128xf32>
    %17 = tpu.matmul %15, %16, %cst_14 {dimension_numbers = #tpu.dot_dimension_numbers<[1], [0], [0], [1], [0, 0, 1, 1], [], []>} : vector<256x128xf32>, vector<128x128xf32>, vector<256x128xf32> -> vector<256x128xf32>
    %18 = vector.broadcast %3 : vector<1x128xf32> to vector<256x128xf32>
    %19 = arith.addf %17, %18 : vector<256x128xf32>
    %20 = vector.shape_cast %19 : vector<256x128xf32> to vector<32x8x128xf32>
    %cst_15 = arith.constant dense<0xFF800000> : vector<32x128xf32>
    %21 = vector.multi_reduction <maximumf>, %20, %cst_15 [1] : vector<32x8x128xf32> to vector<32x128xf32>
    %22 = vector.shape_cast %21 : vector<32x128xf32> to vector<32x1x128xf32>
    %23 = vector.broadcast %22 : vector<32x1x128xf32> to vector<32x8x128xf32>
    %24 = arith.subf %20, %23 : vector<32x8x128xf32>
    %25 = math.exp %24 : vector<32x8x128xf32>
    %cst_16 = arith.constant dense<0.000000e+00> : vector<32x128xf32>
    %26 = vector.multi_reduction <add>, %25, %cst_16 [1] : vector<32x8x128xf32> to vector<32x128xf32>
    %27 = vector.shape_cast %26 : vector<32x128xf32> to vector<32x1x128xf32>
    %28 = tpu.reciprocal %27 : vector<32x1x128xf32> -> vector<32x1x128xf32>
    %29 = vector.broadcast %28 : vector<32x1x128xf32> to vector<32x8x128xf32>
    %30 = arith.mulf %25, %29 : vector<32x8x128xf32>
    %31 = vector.shape_cast %30 : vector<32x8x128xf32> to vector<256x128xf32>
    %c0_17 = arith.constant 0 : index
    %c0_18 = arith.constant 0 : index
    %32 = vector.load %arg6[%c0_17, %c0_18] : memref<256x128xf32, #tpu.memory_space<vmem>>, vector<256x128xf32>
    tpu.vector_store %arg6[%c0_17, %c0_18], %31 {strides = array<i32>} : memref<256x128xf32, #tpu.memory_space<vmem>>, vector<256x128xf32>,
    return
  }
  func.func @transform_0(%arg0: i32) -> (i32, i32) {
    %c0_i32 = arith.constant 0 : i32
    %c0_i32_0 = arith.constant 0 : i32
    return %arg0, %c0_i32 : i32, i32
  }
  func.func @transform_1(%arg0: i32) -> (i32, i32) {
    %c0_i32 = arith.constant 0 : i32
    %c0_i32_0 = arith.constant 0 : i32
    %c0_i32_1 = arith.constant 0 : i32
    return %c0_i32, %c0_i32_0 : i32, i32
  }
  func.func @transform_2(%arg0: i32) -> (i32, i32) {
    %c0_i32 = arith.constant 0 : i32
    %c0_i32_0 = arith.constant 0 : i32
    %c0_i32_1 = arith.constant 0 : i32
    return %c0_i32, %c0_i32_0 : i32, i32
  }
  func.func @transform_3(%arg0: i32) -> (i32, i32) {
    %c0_i32 = arith.constant 0 : i32
    %c0_i32_0 = arith.constant 0 : i32
    %c0_i32_1 = arith.constant 0 : i32
    return %c0_i32, %c0_i32_0 : i32, i32
  }
  func.func @transform_4(%arg0: i32) -> (i32, i32) {
    %c0_i32 = arith.constant 0 : i32
    %c0_i32_0 = arith.constant 0 : i32
    %c0_i32_1 = arith.constant 0 : i32
    return %c0_i32, %c0_i32_0 : i32, i32
  }
  func.func @transform_5(%arg0: i32) -> (i32, i32) {
    %c0_i32 = arith.constant 0 : i32
    %c0_i32_0 = arith.constant 0 : i32
    return %arg0, %c0_i32 : i32, i32
  }
}

</mosaic_0001>

<llo_original>
// kernel: net_forward_batched.1
$region0: #{net_forward_batched.1}
  #allocation0 [shape = 'u32[]', space=smem, size = 0x4, offset = 0x4, fixed_abs, tag = 'smem constant byte address 0x4 - core index']
  #allocation1 [shape = 'u32[144,128]{1,0:T(1,128)}', space=vmem, size = 0x12000, scoped, tag = 'internal scratch']
  %s0 = inlined_call_operand.vmem [shape: f32[512,32], index: 0, kind: input, shape index: {}]
  %s1 = inlined_call_operand.vmem [shape: f32[32,128], index: 1, kind: input, shape index: {}]
  %s2 = inlined_call_operand.vmem [shape: f32[128,128], index: 2, kind: input, shape index: {}]
  %s3 = inlined_call_operand.vmem [shape: f32[128,128], index: 3, kind: input, shape index: {}]
  %s4 = inlined_call_operand.vmem [shape: f32[3,128], index: 4, kind: input, shape index: {}]
  %s5 = inlined_call_operand.vmem [shape: f32[512,128], index: 5, kind: output, shape index: {}]
  %s6 = sld [smem:[#allocation0]]
  $region53: #{net_forward_batched.1} parent=0
    _
  %s8 = ssub.s32 1, %s6
  %s9 = scalar_select 0, %s8, %s6
  loop: start=0, step=1, limit=4
  $region2: #{net_forward_batched.1} parent=0 // loop_pre_header
    _
  $region3: #{net_forward_batched.1} parent=0 // loop_header
    %s11 = sphi 0, %s15
    %p12 = scmp.ge.s32.totalorder %s11, 4
    %s21 = sphi 0, %s23
    %s24 = sphi 0, %s21
    %s25 = sphi 0, %s24
    %s41 = sphi 0, %s25
    %s45 = sphi 0, %s45
    %s47 = sphi 0, %s45
    %s48 = sphi 0, %s47
    %s62 = sphi 0, %s48
    %s66 = sphi 0, %s66
    %s68 = sphi 0, %s66
    %s69 = sphi 0, %s68
    %s83 = sphi 0, %s69
    %s87 = sphi 0, %s87
    %s89 = sphi 0, %s87
    %s90 = sphi 0, %s89
    %s104 = sphi 0, %s90
    %s108 = sphi 0, %s108
    %s110 = sphi 0, %s108
    %s111 = sphi 0, %s110
    %s125 = sphi 0, %s111
    %s131 = sphi 0, %s133
    %s134 = sphi 0, %s131
    %s135 = sphi 0, %s134
    %s151 = sphi 0, %s135
  $region4: #{net_forward_batched.1} parent=0 // loop_header_branch
    %14 = sbr.rel (%p12) target = $region8
  $region5: #{net_forward_batched.1} parent=0 // loop_body
    %s16 = ssub.s32 %s11, 1
    %s17 = ssub.s32 %s11, 2
    %s18 = sadd.s32 %s11, 1
    %s19 = ssub.s32 %s11, %s18
    %p20 = scmp.eq.s32.totalorder %s19, 0
    %s22 = sadd.s32 %s21, 1
    %s23 = scalar_select %p20, %s21, %s22
    %p26 = pneg %p20
    %p27 = scmp.eq.s32.totalorder %s11, 1
    %p28 = por %p26, %p27
    %p29 = scmp.ne.s32.totalorder %s21, %s24
    %p30 = scmp.eq.s32.totalorder %s11, 0
    %p31 = por %p29, %p30
    %p32 = scmp.ne.s32.totalorder %s21, %s24
    %p33 = scmp.eq.s32.totalorder %s16, 1
    %p34 = por %p32, %p33
    %p35 = scmp.ne.s32.totalorder %s24, %s25
    %p36 = scmp.eq.s32.totalorder %s16, 0
    %p37 = por %p35, %p36
    %p38 = scmp.ne.s32.totalorder %s24, %s25
    %p39 = scmp.eq.s32.totalorder %s17, 1
    %p40 = por %p38, %p39
    %p42 = scmp.ne.s32.totalorder %s25, %s41
    %p43 = scmp.eq.s32.totalorder %s17, 0
    %p44 = por %p42, %p43
    %s46 = sadd.s32 %s45, 1
    %p49 = scmp.eq.s32.totalorder %s11, 1
    %p50 = scmp.ne.s32.totalorder %s45, %s47
    %p51 = scmp.eq.s32.totalorder %s11, 0
    %p52 = por %p50, %p51
    %p53 = scmp.ne.s32.totalorder %s45, %s47
    %p54 = scmp.eq.s32.totalorder %s16, 1
    %p55 = por %p53, %p54
    %p56 = scmp.ne.s32.totalorder %s47, %s48
    %p57 = scmp.eq.s32.totalorder %s16, 0
    %p58 = por %p56, %p57
    %p59 = scmp.ne.s32.totalorder %s47, %s48
    %p60 = scmp.eq.s32.totalorder %s17, 1
    %p61 = por %p59, %p60
    %p63 = scmp.ne.s32.totalorder %s48, %s62
    %p64 = scmp.eq.s32.totalorder %s17, 0
    %p65 = por %p63, %p64
    %s67 = sadd.s32 %s66, 1
    %p70 = scmp.eq.s32.totalorder %s11, 1
    %p71 = scmp.ne.s32.totalorder %s66, %s68
    %p72 = scmp.eq.s32.totalorder %s11, 0
    %p73 = por %p71, %p72
    %p74 = scmp.ne.s32.totalorder %s66, %s68
    %p75 = scmp.eq.s32.totalorder %s16, 1
    %p76 = por %p74, %p75
    %p77 = scmp.ne.s32.totalorder %s68, %s69
    %p78 = scmp.eq.s32.totalorder %s16, 0
    %p79 = por %p77, %p78
    %p80 = scmp.ne.s32.totalorder %s68, %s69
    %p81 = scmp.eq.s32.totalorder %s17, 1
    %p82 = por %p80, %p81
    %p84 = scmp.ne.s32.totalorder %s69, %s83
    %p85 = scmp.eq.s32.totalorder %s17, 0
    %p86 = por %p84, %p85
    %s88 = sadd.s32 %s87, 1
    %p91 = scmp.eq.s32.totalorder %s11, 1
    %p92 = scmp.ne.s32.totalorder %s87, %s89
    %p93 = scmp.eq.s32.totalorder %s11, 0
    %p94 = por %p92, %p93
    %p95 = scmp.ne.s32.totalorder %s87, %s89
    %p96 = scmp.eq.s32.totalorder %s16, 1
    %p97 = por %p95, %p96
    %p98 = scmp.ne.s32.totalorder %s89, %s90
    %p99 = scmp.eq.s32.totalorder %s16, 0
    %p100 = por %p98, %p99
    %p101 = scmp.ne.s32.totalorder %s89, %s90
    %p102 = scmp.eq.s32.totalorder %s17, 1
    %p103 = por %p101, %p102
    %p105 = scmp.ne.s32.totalorder %s90, %s104
    %p106 = scmp.eq.s32.totalorder %s17, 0
    %p107 = por %p105, %p106
    %s109 = sadd.s32 %s108, 1
    %p112 = scmp.eq.s32.totalorder %s11, 1
    %p113 = scmp.ne.s32.totalorder %s108, %s110
    %p114 = scmp.eq.s32.totalorder %s11, 0
    %p115 = por %p113, %p114
    %p116 = scmp.ne.s32.totalorder %s108, %s110
    %p117 = scmp.eq.s32.totalorder %s16, 1
    %p118 = por %p116, %p117
    %p119 = scmp.ne.s32.totalorder %s110, %s111
    %p120 = scmp.eq.s32.totalorder %s16, 0
    %p121 = por %p119, %p120
    %p122 = scmp.ne.s32.totalorder %s110, %s111
    %p123 = scmp.eq.s32.totalorder %s17, 1
    %p124 = por %p122, %p123
    %p126 = scmp.ne.s32.totalorder %s111, %s125
    %p127 = scmp.eq.s32.totalorder %s17, 0
    %p128 = por %p126, %p127
    %s129 = ssub.s32 %s11, %s18
    %p130 = scmp.eq.s32.totalorder %s129, 0
    %s132 = sadd.s32 %s131, 1
    %s133 = scalar_select %p130, %s131, %s132
    %p136 = pneg %p130
    %p137 = scmp.eq.s32.totalorder %s11, 1
    %p138 = por %p136, %p137
    %p139 = scmp.ne.s32.totalorder %s131, %s134
    %p140 = scmp.eq.s32.totalorder %s11, 0
    %p141 = por %p139, %p140
    %p142 = scmp.ne.s32.totalorder %s131, %s134
    %p143 = scmp.eq.s32.totalorder %s16, 1
    %p144 = por %p142, %p143
    %p145 = scmp.ne.s32.totalorder %s134, %s135
    %p146 = scmp.eq.s32.totalorder %s16, 0
    %p147 = por %p145, %p146
    %p148 = scmp.ne.s32.totalorder %s134, %s135
    %p149 = scmp.eq.s32.totalorder %s17, 1
    %p150 = por %p148, %p149
    %p152 = scmp.ne.s32.totalorder %s135, %s151
    %p153 = scmp.eq.s32.totalorder %s17, 0
    %p154 = por %p152, %p153
    %p155 = scmp.le.s32.totalorder 1, %s11
    %p156 = scmp.lt.s32.totalorder %s11, 3
    %p157 = pnand %p155, %p156
    %p158 = pneg %p157
    // Predicated region
    $region9: #{net_forward_batched.1} parent=5 // pred_check
      _
    $region10: #{net_forward_batched.1} parent=5 // pred_check_branch
      %160 = sbr.rel (%p157) target = $region12
    $region11: #{net_forward_batched.1} parent=5 // pred_region
      %s161 = ssub.s32 %s11, 1
      // Predicated region
      $region13: #{net_forward_batched.1} parent=11 // pred_check
        %p162 = pneg %p58
      $region14: #{net_forward_batched.1} parent=11 // pred_check_branch
        %164 = sbr.rel (%p162) target = $region16
      $region15: #{net_forward_batched.1} parent=11 // pred_region
        _
      $region16: #{net_forward_batched.1} parent=11 // pred_fallthru
        _
      // Predicated region
      $region17: #{net_forward_batched.1} parent=11 // pred_check
        %p165 = pneg %p79
      $region18: #{net_forward_batched.1} parent=11 // pred_check_branch
        %167 = sbr.rel (%p165) target = $region20
      $region19: #{net_forward_batched.1} parent=11 // pred_region
        _
      $region20: #{net_forward_batched.1} parent=11 // pred_fallthru
        _
      // Predicated region
      $region21: #{net_forward_batched.1} parent=11 // pred_check
        %p168 = pneg %p100
      $region22: #{net_forward_batched.1} parent=11 // pred_check_branch
        %170 = sbr.rel (%p168) target = $region24
      $region23: #{net_forward_batched.1} parent=11 // pred_region
        _
      $region24: #{net_forward_batched.1} parent=11 // pred_fallthru
        _
      // Predicated region
      $region25: #{net_forward_batched.1} parent=11 // pred_check
        %p171 = pneg %p121
      $region26: #{net_forward_batched.1} parent=11 // pred_check_branch
        %173 = sbr.rel (%p171) target = $region28
      $region27: #{net_forward_batched.1} parent=11 // pred_region
        _
      $region28: #{net_forward_batched.1} parent=11 // pred_fallthru
        _
    $region12: #{net_forward_batched.1} parent=5 // pred_fallthru
      _
    %p174 = scmp.lt.s32.totalorder %s11, 2
    // Predicated region
    $region29: #{net_forward_batched.1} parent=5 // pred_check
      %p175 = pneg %p174
    $region30: #{net_forward_batched.1} parent=5 // pred_check_branch
      %177 = sbr.rel (%p175) target = $region32
    $region31: #{net_forward_batched.1} parent=5 // pred_region
      // Predicated region
      $region33: #{net_forward_batched.1} parent=31 // pred_check
        %p178 = pneg %p31
      $region34: #{net_forward_batched.1} parent=31 // pred_check_branch
        %180 = sbr.rel (%p178) target = $region36
      $region35: #{net_forward_batched.1} parent=31 // pred_region
        %s181 = smul.u32 32, %s11
        %p182 = scmp.lt.s32.totalorder %s181, 63
        %s183 = scalar_select %p182, %s181, 63
        %s184 = smul.addr %s183, 8
        %s185 = scalar_lea.vmem %s0, %s184
        %s186 = smul.u32 32, %s11
      $region36: #{net_forward_batched.1} parent=31 // pred_fallthru
        _
    $region32: #{net_forward_batched.1} parent=5 // pred_fallthru
      _
    %p187 = scmp.le.s32.totalorder 1, %s11
    %p188 = scmp.lt.s32.totalorder %s11, 3
    %p189 = pnand %p187, %p188
    %p190 = pneg %p189
    // Predicated region
    $region37: #{net_forward_batched.1} parent=5 // pred_check
      _
    $region38: #{net_forward_batched.1} parent=5 // pred_check_branch
      %192 = sbr.rel (%p189) target = $region40
    $region39: #{net_forward_batched.1} parent=5 // pred_region
      %s193 = ssub.s32 %s11, 1
      %s194 = smul.u32 32, %s16
      %p195 = scmp.lt.s32.totalorder %s194, 63
      %s196 = scalar_select %p195, %s194, 63
      %s197 = smul.addr %s196, 8
      %s198 = scalar_lea.vmem %s0, %s197
      %p199 = pneg %p37
      %p200 = pneg %p34
      %p201 = pneg %p58
      %p202 = pneg %p55
      %p203 = pneg %p79
      %p204 = pneg %p76
      %p205 = pneg %p100
      %p206 = pneg %p97
      %p207 = pneg %p121
      %p208 = pneg %p118
      %p209 = pneg %p147
      %p210 = pneg %p144
      %s211 = smul.u32 32, %s16
      %p212 = scmp.lt.s32.totalorder %s211, 63
      %s213 = scalar_select %p212, %s211, 63
      %s214 = smul.addr %s213, 8
      %s215 = scalar_lea.vmem %s5, %s214
      %s216 = smul.u32 32, %s16
      %p217 = scmp.lt.s32.totalorder %s216, 63
      %s218 = scalar_select %p217, %s216, 63
      %s219 = smul.addr %s218, 8
      %s220 = scalar_lea.vmem %s0, %s219
      %s221 = smul.u32 32, %s16
      %s222 = smul.u32 32, %s16
      %p223 = scmp.lt.s32.totalorder %s222, 63
      %s224 = scalar_select %p223, %s222, 63
      %s225 = smul.addr %s224, 8
      %s226 = scalar_lea.vmem %s5, %s225
      %s227 = smul.u32 32, %s16
      %v228 = vld [vmem:[%s220] sm:$0xff]
      %v229 = vld [vmem:[%s220 + $0x8] sm:$0xff]
      %v230 = vld [vmem:[%s220 + $0x10] sm:$0xff]
      %v231 = vld [vmem:[%s220 + $0x18] sm:$0xff]
      %v232 = vld [vmem:[%s220 + $0x20] sm:$0xff]
      %v233 = vld [vmem:[%s220 + $0x28] sm:$0xff]
      %v234 = vld [vmem:[%s220 + $0x30] sm:$0xff]
      %v235 = vld [vmem:[%s220 + $0x38] sm:$0xff]
      %v236 = vld [vmem:[%s220 + $0x40] sm:$0xff]
      %v237 = vld [vmem:[%s220 + $0x48] sm:$0xff]
      %v238 = vld [vmem:[%s220 + $0x50] sm:$0xff]
      %v239 = vld [vmem:[%s220 + $0x58] sm:$0xff]
      %v240 = vld [vmem:[%s220 + $0x60] sm:$0xff]
      %v241 = vld [vmem:[%s220 + $0x68] sm:$0xff]
      %v242 = vld [vmem:[%s220 + $0x70] sm:$0xff]
      %v243 = vld [vmem:[%s220 + $0x78] sm:$0xff]
      %v244 = vld [vmem:[%s220 + $0x80] sm:$0xff]
      %v245 = vld [vmem:[%s220 + $0x88] sm:$0xff]
      %v246 = vld [vmem:[%s220 + $0x90] sm:$0xff]
      %v247 = vld [vmem:[%s220 + $0x98] sm:$0xff]
      %v248 = vld [vmem:[%s220 + $0xa0] sm:$0xff]
      %v249 = vld [vmem:[%s220 + $0xa8] sm:$0xff]
      %v250 = vld [vmem:[%s220 + $0xb0] sm:$0xff]
      %v251 = vld [vmem:[%s220 + $0xb8] sm:$0xff]
      %v252 = vld [vmem:[%s220 + $0xc0] sm:$0xff]
      %v253 = vld [vmem:[%s220 + $0xc8] sm:$0xff]
      %v254 = vld [vmem:[%s220 + $0xd0] sm:$0xff]
      %v255 = vld [vmem:[%s220 + $0xd8] sm:$0xff]
      %v256 = vld [vmem:[%s220 + $0xe0] sm:$0xff]
      %v257 = vld [vmem:[%s220 + $0xe8] sm:$0xff]
      %v258 = vld [vmem:[%s220 + $0xf0] sm:$0xff]
      %v259 = vld [vmem:[%s220 + $0xf8] sm:$0xff]
      %v260 = vld [vmem:[%s4] sm:$0x1]
      %v261 = vld [vmem:[%s4 + $0x1] sm:$0x1]
      %v262 = vld [vmem:[%s4 + $0x2] sm:$0x1]
      %v263 = vld [vmem:[%s1] sm:$0xff]
      %v264 = vld [vmem:[%s1 + $0x8] sm:$0xff]
      %v265 = vld [vmem:[%s1 + $0x10] sm:$0xff]
      %v266 = vld [vmem:[%s1 + $0x18] sm:$0xff]
      %v267 = vlaneseq
      %v268 = vshrl.u32 %v267, 7
      %v269 = vsub.s32 0, %v268
      %v270 = vrot.slane %v260, %v269
      %vm271 = vcmask 261120
      %v273 = vsel %vm271, %v228, 0
      %v276 = vsel %vm271, %v229, 0
      %v279 = vsel %vm271, %v230, 0
      %v282 = vsel %vm271, %v231, 0
      %v285 = vsel %vm271, %v232, 0
      %v288 = vsel %vm271, %v233, 0
      %v291 = vsel %vm271, %v234, 0
      %v294 = vsel %vm271, %v235, 0
      %v297 = vsel %vm271, %v236, 0
      %v300 = vsel %vm271, %v237, 0
      %v303 = vsel %vm271, %v238, 0
      %v306 = vsel %vm271, %v239, 0
      %v309 = vsel %vm271, %v240, 0
      %v312 = vsel %vm271, %v241, 0
      %v315 = vsel %vm271, %v242, 0
      %v318 = vsel %vm271, %v243, 0
      %v321 = vsel %vm271, %v244, 0
      %v324 = vsel %vm271, %v245, 0
      %v327 = vsel %vm271, %v246, 0
      %v330 = vsel %vm271, %v247, 0
      %v333 = vsel %vm271, %v248, 0
      %v336 = vsel %vm271, %v249, 0
      %v339 = vsel %vm271, %v250, 0
      %v342 = vsel %vm271, %v251, 0
      %v345 = vsel %vm271, %v252, 0
      %v348 = vsel %vm271, %v253, 0
      %v351 = vsel %vm271, %v254, 0
      %v354 = vsel %vm271, %v255, 0
      %v357 = vsel %vm271, %v256, 0
      %v360 = vsel %vm271, %v257, 0
      %v363 = vsel %vm271, %v258, 0
      %v366 = vsel %vm271, %v259, 0
      %368 = vmatprep.subr.mxu0 0.0
      %369 = vmatpush1.msra.mxu0 %v263
      %370 = vmatprep.subr.mxu0 0.0
      %371 = vmatpush1.msra.mxu0 %v264
      %372 = vmatprep.subr.mxu0 0.0
      %373 = vmatpush1.msra.mxu0 %v265
      %374 = vmatprep.subr.mxu0 0.0
      %375 = vmatpush1.msra.mxu0 %v266
      %376 = vmatprep.subr.mxu0 0.0
      %377 = vmatpush1.msra.mxu0 0.0
      %378 = vmatprep.subr.mxu0 0.0
      %379 = vmatpush1.msra.mxu0 0.0
      %380 = vmatprep.subr.mxu0 0.0
      %381 = vmatpush1.msra.mxu0 0.0
      %382 = vmatprep.subr.mxu0 0.0
      %383 = vmatpush1.msra.mxu0 0.0
      %384 = vmatprep.subr.mxu0 0.0
      %385 = vmatpush1.msra.mxu0 0.0
      %386 = vmatprep.subr.mxu0 0.0
      %387 = vmatpush1.msra.mxu0 0.0
      %388 = vmatprep.subr.mxu0 0.0
      %389 = vmatpush1.msra.mxu0 0.0
      %390 = vmatprep.subr.mxu0 0.0
      %391 = vmatpush1.msra.mxu0 0.0
      %392 = vmatprep.subr.mxu0 0.0
      %393 = vmatpush1.msra.mxu0 0.0
      %394 = vmatprep.subr.mxu0 0.0
      %395 = vmatpush1.msra.mxu0 0.0
      %396 = vmatprep.subr.mxu0 0.0
      %397 = vmatpush1.msra.mxu0 0.0
      %398 = vmatprep.subr.mxu0 0.0
      %399 = vmatpush1.msra.mxu0 0.0
      %400 = vmatprep.subr.mxu0 0.0
      %401 = vmatpush1.msra.mxu0 0.0
      %402 = vmatprep.subr.mxu0 0.0
      %403 = vmatpush1.msra.mxu0 0.0
      %404 = vmatprep.subr.mxu0 0.0
      %405 = vmatpush1.msra.mxu0 0.0
      %406 = vmatprep.subr.mxu0 0.0
      %407 = vmatpush1.msra.mxu0 0.0
      %408 = vmatprep.subr.mxu0 0.0
      %409 = vmatpush1.msra.mxu0 0.0
      %410 = vmatprep.subr.mxu0 0.0
      %411 = vmatpush1.msra.mxu0 0.0
      %412 = vmatprep.subr.mxu0 0.0
      %413 = vmatpush1.msra.mxu0 0.0
      %414 = vmatprep.subr.mxu0 0.0
      %415 = vmatpush1.msra.mxu0 0.0
      %416 = vmatprep.subr.mxu0 0.0
      %417 = vmatpush1.msra.mxu0 0.0
      %418 = vmatprep.subr.mxu0 0.0
      %419 = vmatpush1.msra.mxu0 0.0
      %420 = vmatprep.subr.mxu0 0.0
      %421 = vmatpush1.msra.mxu0 0.0
      %422 = vmatprep.subr.mxu0 0.0
      %423 = vmatpush1.msra.mxu0 0.0
      %424 = vmatprep.subr.mxu0 0.0
      %425 = vmatpush1.msra.mxu0 0.0
      %426 = vmatprep.subr.mxu0 0.0
      %427 = vmatpush1.msra.mxu0 0.0
      %428 = vmatprep.subr.mxu0 0.0
      %429 = vmatpush1.msra.mxu0 0.0
      %430 = vmatprep.subr.mxu0 0.0
      %431 = vmatpush1.msra.mxu0 0.0
      %432 = vmatprep.mubr.f32.mxu0 0.0
      %433 = vmatmul.mubr.f32.gmra.mrb[0].mxu0 %v273
      %v434 = vpop.f32.mrb[0].mxu0
      %v435 = vadd.f32 %v270, %v434
      %v436 = vpop.f32.mrb[0].mxu0
      %437 = vmatprep.mubr.f32.mxu0 0.0
      %438 = vmatmul.mubr.f32.gmra.mrb[0].mxu0 %v276
      %v439 = vpop.f32.mrb[0].mxu0
      %v440 = vadd.f32 %v270, %v439
      %v441 = vpop.f32.mrb[0].mxu0
      %442 = vmatprep.mubr.f32.mxu0 0.0
      %443 = vmatmul.mubr.f32.gmra.mrb[0].mxu0 %v279
      %v444 = vpop.f32.mrb[0].mxu0
      %v445 = vadd.f32 %v270, %v444
      %v446 = vpop.f32.mrb[0].mxu0
      %447 = vmatprep.mubr.f32.mxu0 0.0
      %448 = vmatmul.mubr.f32.gmra.mrb[0].mxu0 %v282
      %v449 = vpop.f32.mrb[0].mxu0
      %v450 = vadd.f32 %v270, %v449
      %v451 = vpop.f32.mrb[0].mxu0
      %452 = vmatprep.mubr.f32.mxu0 0.0
      %453 = vmatmul.mubr.f32.gmra.mrb[0].mxu0 %v285
      %v454 = vpop.f32.mrb[0].mxu0
      %v455 = vadd.f32 %v270, %v454
      %v456 = vpop.f32.mrb[0].mxu0
      %457 = vmatprep.mubr.f32.mxu0 0.0
      %458 = vmatmul.mubr.f32.gmra.mrb[0].mxu0 %v288
      %v459 = vpop.f32.mrb[0].mxu0
      %v460 = vadd.f32 %v270, %v459
      %v461 = vpop.f32.mrb[0].mxu0
      %462 = vmatprep.mubr.f32.mxu0 0.0
      %463 = vmatmul.mubr.f32.gmra.mrb[0].mxu0 %v291
      %v464 = vpop.f32.mrb[0].mxu0
      %v465 = vadd.f32 %v270, %v464
      %v466 = vpop.f32.mrb[0].mxu0
      %467 = vmatprep.mubr.f32.mxu0 0.0
      %468 = vmatmul.mubr.f32.gmra.mrb[0].mxu0 %v294
      %v469 = vpop.f32.mrb[0].mxu0
      %v470 = vadd.f32 %v270, %v469
      %v471 = vpop.f32.mrb[0].mxu0
      %472 = vmatprep.mubr.f32.mxu0 0.0
      %473 = vmatmul.mubr.f32.gmra.mrb[0].mxu0 %v297
      %v474 = vpop.f32.mrb[0].mxu0
      %v475 = vadd.f32 %v270, %v474
      %v476 = vpop.f32.mrb[0].mxu0
      %477 = vmatprep.mubr.f32.mxu0 0.0
      %478 = vmatmul.mubr.f32.gmra.mrb[0].mxu0 %v300
      %v479 = vpop.f32.mrb[0].mxu0
      %v480 = vadd.f32 %v270, %v479
      %v481 = vpop.f32.mrb[0].mxu0
      %482 = vmatprep.mubr.f32.mxu0 0.0
      %483 = vmatmul.mubr.f32.gmra.mrb[0].mxu0 %v303
      %v484 = vpop.f32.mrb[0].mxu0
      %v485 = vadd.f32 %v270, %v484
      %v486 = vpop.f32.mrb[0].mxu0
      %487 = vmatprep.mubr.f32.mxu0 0.0
      %488 = vmatmul.mubr.f32.gmra.mrb[0].mxu0 %v306
      %v489 = vpop.f32.mrb[0].mxu0
      %v490 = vadd.f32 %v270, %v489
      %v491 = vpop.f32.mrb[0].mxu0
      %492 = vmatprep.mubr.f32.mxu0 0.0
      %493 = vmatmul.mubr.f32.gmra.mrb[0].mxu0 %v309
      %v494 = vpop.f32.mrb[0].mxu0
      %v495 = vadd.f32 %v270, %v494
      %v496 = vpop.f32.mrb[0].mxu0
      %497 = vmatprep.mubr.f32.mxu0 0.0
      %498 = vmatmul.mubr.f32.gmra.mrb[0].mxu0 %v312
      %v499 = vpop.f32.mrb[0].mxu0
      %v500 = vadd.f32 %v270, %v499
      %v501 = vpop.f32.mrb[0].mxu0
      %502 = vmatprep.mubr.f32.mxu0 0.0
      %503 = vmatmul.mubr.f32.gmra.mrb[0].mxu0 %v315
      %v504 = vpop.f32.mrb[0].mxu0
      %v505 = vadd.f32 %v270, %v504
      %v506 = vpop.f32.mrb[0].mxu0
      %507 = vmatprep.mubr.f32.mxu0 0.0
      %508 = vmatmul.mubr.f32.gmra.mrb[0].mxu0 %v318
      %v509 = vpop.f32.mrb[0].mxu0
      %v510 = vadd.f32 %v270, %v509
      %v511 = vpop.f32.mrb[0].mxu0
      %512 = vmatprep.mubr.f32.mxu0 0.0
      %513 = vmatmul.mubr.f32.gmra.mrb[0].mxu0 %v321
      %v514 = vpop.f32.mrb[0].mxu0
      %v515 = vadd.f32 %v270, %v514
      %v516 = vpop.f32.mrb[0].mxu0
      %517 = vmatprep.mubr.f32.mxu0 0.0
      %518 = vmatmul.mubr.f32.gmra.mrb[0].mxu0 %v324
      %v519 = vpop.f32.mrb[0].mxu0
      %v520 = vadd.f32 %v270, %v519
      %v521 = vpop.f32.mrb[0].mxu0
      %522 = vmatprep.mubr.f32.mxu0 0.0
      %523 = vmatmul.mubr.f32.gmra.mrb[0].mxu0 %v327
      %v524 = vpop.f32.mrb[0].mxu0
      %v525 = vadd.f32 %v270, %v524
      %v526 = vpop.f32.mrb[0].mxu0
      %527 = vmatprep.mubr.f32.mxu0 0.0
      %528 = vmatmul.mubr.f32.gmra.mrb[0].mxu0 %v330
      %v529 = vpop.f32.mrb[0].mxu0
      %v530 = vadd.f32 %v270, %v529
      %v531 = vpop.f32.mrb[0].mxu0
      %532 = vmatprep.mubr.f32.mxu0 0.0
      %533 = vmatmul.mubr.f32.gmra.mrb[0].mxu0 %v333
      %v534 = vpop.f32.mrb[0].mxu0
      %v535 = vadd.f32 %v270, %v534
      %v536 = vpop.f32.mrb[0].mxu0
      %537 = vmatprep.mubr.f32.mxu0 0.0
      %538 = vmatmul.mubr.f32.gmra.mrb[0].mxu0 %v336
      %v539 = vpop.f32.mrb[0].mxu0
      %v540 = vadd.f32 %v270, %v539
      %v541 = vpop.f32.mrb[0].mxu0
      %542 = vmatprep.mubr.f32.mxu0 0.0
      %543 = vmatmul.mubr.f32.gmra.mrb[0].mxu0 %v339
      %v544 = vpop.f32.mrb[0].mxu0
      %v545 = vadd.f32 %v270, %v544
      %v546 = vpop.f32.mrb[0].mxu0
      %547 = vmatprep.mubr.f32.mxu0 0.0
      %548 = vmatmul.mubr.f32.gmra.mrb[0].mxu0 %v342
      %v549 = vpop.f32.mrb[0].mxu0
      %v550 = vadd.f32 %v270, %v549
      %v551 = vpop.f32.mrb[0].mxu0
      %552 = vmatprep.mubr.f32.mxu0 0.0
      %553 = vmatmul.mubr.f32.gmra.mrb[0].mxu0 %v345
      %v554 = vpop.f32.mrb[0].mxu0
      %v555 = vadd.f32 %v270, %v554
      %v556 = vpop.f32.mrb[0].mxu0
      %557 = vmatprep.mubr.f32.mxu0 0.0
      %558 = vmatmul.mubr.f32.gmra.mrb[0].mxu0 %v348
      %v559 = vpop.f32.mrb[0].mxu0
      %v560 = vadd.f32 %v270, %v559
      %v561 = vpop.f32.mrb[0].mxu0
      %562 = vmatprep.mubr.f32.mxu0 0.0
      %563 = vmatmul.mubr.f32.gmra.mrb[0].mxu0 %v351
      %v564 = vpop.f32.mrb[0].mxu0
      %v565 = vadd.f32 %v270, %v564
      %v566 = vpop.f32.mrb[0].mxu0
      %567 = vmatprep.mubr.f32.mxu0 0.0
      %568 = vmatmul.mubr.f32.gmra.mrb[0].mxu0 %v354
      %v569 = vpop.f32.mrb[0].mxu0
      %v570 = vadd.f32 %v270, %v569
      %v571 = vpop.f32.mrb[0].mxu0
      %572 = vmatprep.mubr.f32.mxu0 0.0
      %573 = vmatmul.mubr.f32.gmra.mrb[0].mxu0 %v357
      %v574 = vpop.f32.mrb[0].mxu0
      %v575 = vadd.f32 %v270, %v574
      %v576 = vpop.f32.mrb[0].mxu0
      %577 = vmatprep.mubr.f32.mxu0 0.0
      %578 = vmatmul.mubr.f32.gmra.mrb[0].mxu0 %v360
      %v579 = vpop.f32.mrb[0].mxu0
      %v580 = vadd.f32 %v270, %v579
      %v581 = vpop.f32.mrb[0].mxu0
      %582 = vmatprep.mubr.f32.mxu0 0.0
      %583 = vmatmul.mubr.f32.gmra.mrb[0].mxu0 %v363
      %v584 = vpop.f32.mrb[0].mxu0
      %v585 = vadd.f32 %v270, %v584
      %v586 = vpop.f32.mrb[0].mxu0
      %587 = vmatprep.mubr.f32.mxu0 0.0
      %588 = vmatmul.mubr.f32.gmra.mrb[0].mxu0 %v366
      %v589 = vpop.f32.mrb[0].mxu0
      %v590 = vadd.f32 %v270, %v589
      %v591 = vpop.f32.mrb[0].mxu0
      %592 = vdwg.mxu0
      %v593 = vmax.f32 %v435, 0.0
      %v594 = vmax.f32 %v440, 0.0
      %v595 = vmax.f32 %v445, 0.0
      %v596 = vmax.f32 %v450, 0.0
      %v597 = vmax.f32 %v455, 0.0
      %v598 = vmax.f32 %v460, 0.0
      %v599 = vmax.f32 %v465, 0.0
      %v600 = vmax.f32 %v470, 0.0
      %v601 = vmax.f32 %v475, 0.0
      %v602 = vmax.f32 %v480, 0.0
      %v603 = vmax.f32 %v485, 0.0
      %v604 = vmax.f32 %v490, 0.0
      %v605 = vmax.f32 %v495, 0.0
      %v606 = vmax.f32 %v500, 0.0
      %v607 = vmax.f32 %v505, 0.0
      %v608 = vmax.f32 %v510, 0.0
      %v609 = vmax.f32 %v515, 0.0
      %v610 = vmax.f32 %v520, 0.0
      %v611 = vmax.f32 %v525, 0.0
      %v612 = vmax.f32 %v530, 0.0
      %v613 = vmax.f32 %v535, 0.0
      %v614 = vmax.f32 %v540, 0.0
      %v615 = vmax.f32 %v545, 0.0
      %v616 = vmax.f32 %v550, 0.0
      %v617 = vmax.f32 %v555, 0.0
      %v618 = vmax.f32 %v560, 0.0
      %v619 = vmax.f32 %v565, 0.0
      %v620 = vmax.f32 %v570, 0.0
      %v621 = vmax.f32 %v575, 0.0
      %v622 = vmax.f32 %v580, 0.0
      %v623 = vmax.f32 %v585, 0.0
      %v624 = vmax.f32 %v590, 0.0
      %v625 = vld [vmem:[%s2] sm:$0xff]
      %v626 = vld [vmem:[%s2 + $0x8] sm:$0xff]
      %v627 = vld [vmem:[%s2 + $0x10] sm:$0xff]
      %v628 = vld [vmem:[%s2 + $0x18] sm:$0xff]
      %v629 = vld [vmem:[%s2 + $0x20] sm:$0xff]
      %v630 = vld [vmem:[%s2 + $0x28] sm:$0xff]
      %v631 = vld [vmem:[%s2 + $0x30] sm:$0xff]
      %v632 = vld [vmem:[%s2 + $0x38] sm:$0xff]
      %v633 = vld [vmem:[%s2 + $0x40] sm:$0xff]
      %v634 = vld [vmem:[%s2 + $0x48] sm:$0xff]
      %v635 = vld [vmem:[%s2 + $0x50] sm:$0xff]
      %v636 = vld [vmem:[%s2 + $0x58] sm:$0xff]
      %v637 = vld [vmem:[%s2 + $0x60] sm:$0xff]
      %v638 = vld [vmem:[%s2 + $0x68] sm:$0xff]
      %v639 = vld [vmem:[%s2 + $0x70] sm:$0xff]
      %v640 = vld [vmem:[%s2 + $0x78] sm:$0xff]
      %v641 = vlaneseq
      %v642 = vshrl.u32 %v641, 7
      %v643 = vsub.s32 0, %v642
      %v644 = vrot.slane %v261, %v643
      %645 = vmatprep.subr.mxu0 0.0
      %646 = vmatpush1.msra.mxu0 %v625
      %647 = vmatprep.subr.mxu0 0.0
      %648 = vmatpush1.msra.mxu0 %v626
      %649 = vmatprep.subr.mxu0 0.0
      %650 = vmatpush1.msra.mxu0 %v627
      %651 = vmatprep.subr.mxu0 0.0
      %652 = vmatpush1.msra.mxu0 %v628
      %653 = vmatprep.subr.mxu0 0.0
      %654 = vmatpush1.msra.mxu0 %v629
      %655 = vmatprep.subr.mxu0 0.0
      %656 = vmatpush1.msra.mxu0 %v630
      %657 = vmatprep.subr.mxu0 0.0
      %658 = vmatpush1.msra.mxu0 %v631
      %659 = vmatprep.subr.mxu0 0.0
      %660 = vmatpush1.msra.mxu0 %v632
      %661 = vmatprep.subr.mxu0 0.0
      %662 = vmatpush1.msra.mxu0 %v633
      %663 = vmatprep.subr.mxu0 0.0
      %664 = vmatpush1.msra.mxu0 %v634
      %665 = vmatprep.subr.mxu0 0.0
      %666 = vmatpush1.msra.mxu0 %v635
      %667 = vmatprep.subr.mxu0 0.0
      %668 = vmatpush1.msra.mxu0 %v636
      %669 = vmatprep.subr.mxu0 0.0
      %670 = vmatpush1.msra.mxu0 %v637
      %671 = vmatprep.subr.mxu0 0.0
      %672 = vmatpush1.msra.mxu0 %v638
      %673 = vmatprep.subr.mxu0 0.0
      %674 = vmatpush1.msra.mxu0 %v639
      %675 = vmatprep.subr.mxu0 0.0
      %676 = vmatpush1.msra.mxu0 %v640
      %677 = vmatprep.subr.mxu0 0.0
      %678 = vmatpush1.msra.mxu0 0.0
      %679 = vmatprep.subr.mxu0 0.0
      %680 = vmatpush1.msra.mxu0 0.0
      %681 = vmatprep.subr.mxu0 0.0
      %682 = vmatpush1.msra.mxu0 0.0
      %683 = vmatprep.subr.mxu0 0.0
      %684 = vmatpush1.msra.mxu0 0.0
      %685 = vmatprep.subr.mxu0 0.0
      %686 = vmatpush1.msra.mxu0 0.0
      %687 = vmatprep.subr.mxu0 0.0
      %688 = vmatpush1.msra.mxu0 0.0
      %689 = vmatprep.subr.mxu0 0.0
      %690 = vmatpush1.msra.mxu0 0.0
      %691 = vmatprep.subr.mxu0 0.0
      %692 = vmatpush1.msra.mxu0 0.0
      %693 = vmatprep.subr.mxu0 0.0
      %694 = vmatpush1.msra.mxu0 0.0
      %695 = vmatprep.subr.mxu0 0.0
      %696 = vmatpush1.msra.mxu0 0.0
      %697 = vmatprep.subr.mxu0 0.0
      %698 = vmatpush1.msra.mxu0 0.0
      %699 = vmatprep.subr.mxu0 0.0
      %700 = vmatpush1.msra.mxu0 0.0
      %701 = vmatprep.subr.mxu0 0.0
      %702 = vmatpush1.msra.mxu0 0.0
      %703 = vmatprep.subr.mxu0 0.0
      %704 = vmatpush1.msra.mxu0 0.0
      %705 = vmatprep.subr.mxu0 0.0
      %706 = vmatpush1.msra.mxu0 0.0
      %707 = vmatprep.subr.mxu0 0.0
      %708 = vmatpush1.msra.mxu0 0.0
      %709 = vmatprep.mubr.f32.mxu0 0.0
      %710 = vmatmul.mubr.f32.gmra.mrb[0].mxu0 %v593
      %v711 = vpop.f32.mrb[0].mxu0
      %v712 = vadd.f32 %v644, %v711
      %v713 = vpop.f32.mrb[0].mxu0
      %714 = vmatprep.mubr.f32.mxu0 0.0
      %715 = vmatmul.mubr.f32.gmra.mrb[0].mxu0 %v594
      %v716 = vpop.f32.mrb[0].mxu0
      %v717 = vadd.f32 %v644, %v716
      %v718 = vpop.f32.mrb[0].mxu0
      %719 = vmatprep.mubr.f32.mxu0 0.0
      %720 = vmatmul.mubr.f32.gmra.mrb[0].mxu0 %v595
      %v721 = vpop.f32.mrb[0].mxu0
      %v722 = vadd.f32 %v644, %v721
      %v723 = vpop.f32.mrb[0].mxu0
      %724 = vmatprep.mubr.f32.mxu0 0.0
      %725 = vmatmul.mubr.f32.gmra.mrb[0].mxu0 %v596
      %v726 = vpop.f32.mrb[0].mxu0
      %v727 = vadd.f32 %v644, %v726
      %v728 = vpop.f32.mrb[0].mxu0
      %729 = vmatprep.mubr.f32.mxu0 0.0
      %730 = vmatmul.mubr.f32.gmra.mrb[0].mxu0 %v597
      %v731 = vpop.f32.mrb[0].mxu0
      %v732 = vadd.f32 %v644, %v731
      %v733 = vpop.f32.mrb[0].mxu0
      %734 = vmatprep.mubr.f32.mxu0 0.0
      %735 = vmatmul.mubr.f32.gmra.mrb[0].mxu0 %v598
      %v736 = vpop.f32.mrb[0].mxu0
      %v737 = vadd.f32 %v644, %v736
      %v738 = vpop.f32.mrb[0].mxu0
      %739 = vmatprep.mubr.f32.mxu0 0.0
      %740 = vmatmul.mubr.f32.gmra.mrb[0].mxu0 %v599
      %v741 = vpop.f32.mrb[0].mxu0
      %v742 = vadd.f32 %v644, %v741
      %v743 = vpop.f32.mrb[0].mxu0
      %744 = vmatprep.mubr.f32.mxu0 0.0
      %745 = vmatmul.mubr.f32.gmra.mrb[0].mxu0 %v600
      %v746 = vpop.f32.mrb[0].mxu0
      %v747 = vadd.f32 %v644, %v746
      %v748 = vpop.f32.mrb[0].mxu0
      %749 = vmatprep.mubr.f32.mxu0 0.0
      %750 = vmatmul.mubr.f32.gmra.mrb[0].mxu0 %v601
      %v751 = vpop.f32.mrb[0].mxu0
      %v752 = vadd.f32 %v644, %v751
      %v753 = vpop.f32.mrb[0].mxu0
      %754 = vmatprep.mubr.f32.mxu0 0.0
      %755 = vmatmul.mubr.f32.gmra.mrb[0].mxu0 %v602
      %v756 = vpop.f32.mrb[0].mxu0
      %v757 = vadd.f32 %v644, %v756
      %v758 = vpop.f32.mrb[0].mxu0
      %759 = vmatprep.mubr.f32.mxu0 0.0
      %760 = vmatmul.mubr.f32.gmra.mrb[0].mxu0 %v603
      %v761 = vpop.f32.mrb[0].mxu0
      %v762 = vadd.f32 %v644, %v761
      %v763 = vpop.f32.mrb[0].mxu0
      %764 = vmatprep.mubr.f32.mxu0 0.0
      %765 = vmatmul.mubr.f32.gmra.mrb[0].mxu0 %v604
      %v766 = vpop.f32.mrb[0].mxu0
      %v767 = vadd.f32 %v644, %v766
      %v768 = vpop.f32.mrb[0].mxu0
      %769 = vmatprep.mubr.f32.mxu0 0.0
      %770 = vmatmul.mubr.f32.gmra.mrb[0].mxu0 %v605
      %v771 = vpop.f32.mrb[0].mxu0
      %v772 = vadd.f32 %v644, %v771
      %v773 = vpop.f32.mrb[0].mxu0
      %774 = vmatprep.mubr.f32.mxu0 0.0
      %775 = vmatmul.mubr.f32.gmra.mrb[0].mxu0 %v606
      %v776 = vpop.f32.mrb[0].mxu0
      %v777 = vadd.f32 %v644, %v776
      %v778 = vpop.f32.mrb[0].mxu0
      %779 = vmatprep.mubr.f32.mxu0 0.0
      %780 = vmatmul.mubr.f32.gmra.mrb[0].mxu0 %v607
      %v781 = vpop.f32.mrb[0].mxu0
      %v782 = vadd.f32 %v644, %v781
      %v783 = vpop.f32.mrb[0].mxu0
      %784 = vmatprep.mubr.f32.mxu0 0.0
      %785 = vmatmul.mubr.f32.gmra.mrb[0].mxu0 %v608
      %v786 = vpop.f32.mrb[0].mxu0
      %v787 = vadd.f32 %v644, %v786
      %v788 = vpop.f32.mrb[0].mxu0
      %789 = vmatprep.mubr.f32.mxu0 0.0
      %790 = vmatmul.mubr.f32.gmra.mrb[0].mxu0 %v609
      %v791 = vpop.f32.mrb[0].mxu0
      %v792 = vadd.f32 %v644, %v791
      %v793 = vpop.f32.mrb[0].mxu0
      %794 = vmatprep.mubr.f32.mxu0 0.0
      %795 = vmatmul.mubr.f32.gmra.mrb[0].mxu0 %v610
      %v796 = vpop.f32.mrb[0].mxu0
      %v797 = vadd.f32 %v644, %v796
      %v798 = vpop.f32.mrb[0].mxu0
      %799 = vmatprep.mubr.f32.mxu0 0.0
      %800 = vmatmul.mubr.f32.gmra.mrb[0].mxu0 %v611
      %v801 = vpop.f32.mrb[0].mxu0
      %v802 = vadd.f32 %v644, %v801
      %v803 = vpop.f32.mrb[0].mxu0
      %804 = vmatprep.mubr.f32.mxu0 0.0
      %805 = vmatmul.mubr.f32.gmra.mrb[0].mxu0 %v612
      %v806 = vpop.f32.mrb[0].mxu0
      %v807 = vadd.f32 %v644, %v806
      %v808 = vpop.f32.mrb[0].mxu0
      %809 = vmatprep.mubr.f32.mxu0 0.0
      %810 = vmatmul.mubr.f32.gmra.mrb[0].mxu0 %v613
      %v811 = vpop.f32.mrb[0].mxu0
      %v812 = vadd.f32 %v644, %v811
      %v813 = vpop.f32.mrb[0].mxu0
      %814 = vmatprep.mubr.f32.mxu0 0.0
      %815 = vmatmul.mubr.f32.gmra.mrb[0].mxu0 %v614
      %v816 = vpop.f32.mrb[0].mxu0
      %v817 = vadd.f32 %v644, %v816
      %v818 = vpop.f32.mrb[0].mxu0
      %819 = vmatprep.mubr.f32.mxu0 0.0
      %820 = vmatmul.mubr.f32.gmra.mrb[0].mxu0 %v615
      %v821 = vpop.f32.mrb[0].mxu0
      %v822 = vadd.f32 %v644, %v821
      %v823 = vpop.f32.mrb[0].mxu0
      %824 = vmatprep.mubr.f32.mxu0 0.0
      %825 = vmatmul.mubr.f32.gmra.mrb[0].mxu0 %v616
      %v826 = vpop.f32.mrb[0].mxu0
      %v827 = vadd.f32 %v644, %v826
      %v828 = vpop.f32.mrb[0].mxu0
      %829 = vmatprep.mubr.f32.mxu0 0.0
      %830 = vmatmul.mubr.f32.gmra.mrb[0].mxu0 %v617
      %v831 = vpop.f32.mrb[0].mxu0
      %v832 = vadd.f32 %v644, %v831
      %v833 = vpop.f32.mrb[0].mxu0
      %834 = vmatprep.mubr.f32.mxu0 0.0
      %835 = vmatmul.mubr.f32.gmra.mrb[0].mxu0 %v618
      %v836 = vpop.f32.mrb[0].mxu0
      %v837 = vadd.f32 %v644, %v836
      %v838 = vpop.f32.mrb[0].mxu0
      %839 = vmatprep.mubr.f32.mxu0 0.0
      %840 = vmatmul.mubr.f32.gmra.mrb[0].mxu0 %v619
      %v841 = vpop.f32.mrb[0].mxu0
      %v842 = vadd.f32 %v644, %v841
      %v843 = vpop.f32.mrb[0].mxu0
      %844 = vmatprep.mubr.f32.mxu0 0.0
      %845 = vmatmul.mubr.f32.gmra.mrb[0].mxu0 %v620
      %v846 = vpop.f32.mrb[0].mxu0
      %v847 = vadd.f32 %v644, %v846
      %v848 = vpop.f32.mrb[0].mxu0
      %849 = vmatprep.mubr.f32.mxu0 0.0
      %850 = vmatmul.mubr.f32.gmra.mrb[0].mxu0 %v621
      %v851 = vpop.f32.mrb[0].mxu0
      %v852 = vadd.f32 %v644, %v851
      %v853 = vpop.f32.mrb[0].mxu0
      %854 = vmatprep.mubr.f32.mxu0 0.0
      %855 = vmatmul.mubr.f32.gmra.mrb[0].mxu0 %v622
      %v856 = vpop.f32.mrb[0].mxu0
      %v857 = vadd.f32 %v644, %v856
      %v858 = vpop.f32.mrb[0].mxu0
      %859 = vmatprep.mubr.f32.mxu0 0.0
      %860 = vmatmul.mubr.f32.gmra.mrb[0].mxu0 %v623
      %v861 = vpop.f32.mrb[0].mxu0
      %v862 = vadd.f32 %v644, %v861
      %v863 = vpop.f32.mrb[0].mxu0
      %864 = vmatprep.mubr.f32.mxu0 0.0
      %865 = vmatmul.mubr.f32.gmra.mrb[0].mxu0 %v624
      %v866 = vpop.f32.mrb[0].mxu0
      %v867 = vadd.f32 %v644, %v866
      %v868 = vpop.f32.mrb[0].mxu0
      %869 = vdwg.mxu0
      %v870 = vmax.f32 %v712, 0.0
      %v871 = vmax.f32 %v717, 0.0
      %v872 = vmax.f32 %v722, 0.0
      %v873 = vmax.f32 %v727, 0.0
      %v874 = vmax.f32 %v732, 0.0
      %v875 = vmax.f32 %v737, 0.0
      %v876 = vmax.f32 %v742, 0.0
      %v877 = vmax.f32 %v747, 0.0
      %v878 = vmax.f32 %v752, 0.0
      %v879 = vmax.f32 %v757, 0.0
      %v880 = vmax.f32 %v762, 0.0
      %v881 = vmax.f32 %v767, 0.0
      %v882 = vmax.f32 %v772, 0.0
      %v883 = vmax.f32 %v777, 0.0
      %v884 = vmax.f32 %v782, 0.0
      %v885 = vmax.f32 %v787, 0.0
      %v886 = vmax.f32 %v792, 0.0
      %v887 = vmax.f32 %v797, 0.0
      %v888 = vmax.f32 %v802, 0.0
      %v889 = vmax.f32 %v807, 0.0
      %v890 = vmax.f32 %v812, 0.0
      %v891 = vmax.f32 %v817, 0.0
      %v892 = vmax.f32 %v822, 0.0
      %v893 = vmax.f32 %v827, 0.0
      %v894 = vmax.f32 %v832, 0.0
      %v895 = vmax.f32 %v837, 0.0
      %v896 = vmax.f32 %v842, 0.0
      %v897 = vmax.f32 %v847, 0.0
      %v898 = vmax.f32 %v852, 0.0
      %v899 = vmax.f32 %v857, 0.0
      %v900 = vmax.f32 %v862, 0.0
      %v901 = vmax.f32 %v867, 0.0
      %v902 = vld [vmem:[%s3] sm:$0xff]
      %v903 = vld [vmem:[%s3 + $0x8] sm:$0xff]
      %v904 = vld [vmem:[%s3 + $0x10] sm:$0xff]
      %v905 = vld [vmem:[%s3 + $0x18] sm:$0xff]
      %v906 = vld [vmem:[%s3 + $0x20] sm:$0xff]
      %v907 = vld [vmem:[%s3 + $0x28] sm:$0xff]
      %v908 = vld [vmem:[%s3 + $0x30] sm:$0xff]
      %v909 = vld [vmem:[%s3 + $0x38] sm:$0xff]
      %v910 = vld [vmem:[%s3 + $0x40] sm:$0xff]
      %v911 = vld [vmem:[%s3 + $0x48] sm:$0xff]
      %v912 = vld [vmem:[%s3 + $0x50] sm:$0xff]
      %v913 = vld [vmem:[%s3 + $0x58] sm:$0xff]
      %v914 = vld [vmem:[%s3 + $0x60] sm:$0xff]
      %v915 = vld [vmem:[%s3 + $0x68] sm:$0xff]
      %v916 = vld [vmem:[%s3 + $0x70] sm:$0xff]
      %v917 = vld [vmem:[%s3 + $0x78] sm:$0xff]
      %v918 = vlaneseq
      %v919 = vshrl.u32 %v918, 7
      %v920 = vsub.s32 0, %v919
      %v921 = vrot.slane %v262, %v920
      %922 = vmatprep.subr.mxu0 0.0
      %923 = vmatpush1.msra.mxu0 %v902
      %924 = vmatprep.subr.mxu0 0.0
      %925 = vmatpush1.msra.mxu0 %v903
      %926 = vmatprep.subr.mxu0 0.0
      %927 = vmatpush1.msra.mxu0 %v904
      %928 = vmatprep.subr.mxu0 0.0
      %929 = vmatpush1.msra.mxu0 %v905
      %930 = vmatprep.subr.mxu0 0.0
      %931 = vmatpush1.msra.mxu0 %v906
      %932 = vmatprep.subr.mxu0 0.0
      %933 = vmatpush1.msra.mxu0 %v907
      %934 = vmatprep.subr.mxu0 0.0
      %935 = vmatpush1.msra.mxu0 %v908
      %936 = vmatprep.subr.mxu0 0.0
      %937 = vmatpush1.msra.mxu0 %v909
      %938 = vmatprep.subr.mxu0 0.0
      %939 = vmatpush1.msra.mxu0 %v910
      %940 = vmatprep.subr.mxu0 0.0
      %941 = vmatpush1.msra.mxu0 %v911
      %942 = vmatprep.subr.mxu0 0.0
      %943 = vmatpush1.msra.mxu0 %v912
      %944 = vmatprep.subr.mxu0 0.0
      %945 = vmatpush1.msra.mxu0 %v913
      %946 = vmatprep.subr.mxu0 0.0
      %947 = vmatpush1.msra.mxu0 %v914
      %948 = vmatprep.subr.mxu0 0.0
      %949 = vmatpush1.msra.mxu0 %v915
      %950 = vmatprep.subr.mxu0 0.0
      %951 = vmatpush1.msra.mxu0 %v916
      %952 = vmatprep.subr.mxu0 0.0
      %953 = vmatpush1.msra.mxu0 %v917
      %954 = vmatprep.subr.mxu0 0.0
      %955 = vmatpush1.msra.mxu0 0.0
      %956 = vmatprep.subr.mxu0 0.0
      %957 = vmatpush1.msra.mxu0 0.0
      %958 = vmatprep.subr.mxu0 0.0
      %959 = vmatpush1.msra.mxu0 0.0
      %960 = vmatprep.subr.mxu0 0.0
      %961 = vmatpush1.msra.mxu0 0.0
      %962 = vmatprep.subr.mxu0 0.0
      %963 = vmatpush1.msra.mxu0 0.0
      %964 = vmatprep.subr.mxu0 0.0
      %965 = vmatpush1.msra.mxu0 0.0
      %966 = vmatprep.subr.mxu0 0.0
      %967 = vmatpush1.msra.mxu0 0.0
      %968 = vmatprep.subr.mxu0 0.0
      %969 = vmatpush1.msra.mxu0 0.0
      %970 = vmatprep.subr.mxu0 0.0
      %971 = vmatpush1.msra.mxu0 0.0
      %972 = vmatprep.subr.mxu0 0.0
      %973 = vmatpush1.msra.mxu0 0.0
      %974 = vmatprep.subr.mxu0 0.0
      %975 = vmatpush1.msra.mxu0 0.0
      %976 = vmatprep.subr.mxu0 0.0
      %977 = vmatpush1.msra.mxu0 0.0
      %978 = vmatprep.subr.mxu0 0.0
      %979 = vmatpush1.msra.mxu0 0.0
      %980 = vmatprep.subr.mxu0 0.0
      %981 = vmatpush1.msra.mxu0 0.0
      %982 = vmatprep.subr.mxu0 0.0
      %983 = vmatpush1.msra.mxu0 0.0
      %984 = vmatprep.subr.mxu0 0.0
      %985 = vmatpush1.msra.mxu0 0.0
      %986 = vmatprep.mubr.f32.mxu0 0.0
      %987 = vmatmul.mubr.f32.gmra.mrb[0].mxu0 %v870
      %v988 = vpop.f32.mrb[0].mxu0
      %v989 = vadd.f32 %v921, %v988
      %v990 = vpop.f32.mrb[0].mxu0
      %991 = vmatprep.mubr.f32.mxu0 0.0
      %992 = vmatmul.mubr.f32.gmra.mrb[0].mxu0 %v871
      %v993 = vpop.f32.mrb[0].mxu0
      %v994 = vadd.f32 %v921, %v993
      %v995 = vpop.f32.mrb[0].mxu0
      %996 = vmatprep.mubr.f32.mxu0 0.0
      %997 = vmatmul.mubr.f32.gmra.mrb[0].mxu0 %v872
      %v998 = vpop.f32.mrb[0].mxu0
      %v999 = vadd.f32 %v921, %v998
      %v1000 = vpop.f32.mrb[0].mxu0
      %1001 = vmatprep.mubr.f32.mxu0 0.0
      %1002 = vmatmul.mubr.f32.gmra.mrb[0].mxu0 %v873
      %v1003 = vpop.f32.mrb[0].mxu0
      %v1004 = vadd.f32 %v921, %v1003
      %v1005 = vpop.f32.mrb[0].mxu0
      %1006 = vmatprep.mubr.f32.mxu0 0.0
      %1007 = vmatmul.mubr.f32.gmra.mrb[0].mxu0 %v874
      %v1008 = vpop.f32.mrb[0].mxu0
      %v1009 = vadd.f32 %v921, %v1008
      %v1010 = vpop.f32.mrb[0].mxu0
      %1011 = vmatprep.mubr.f32.mxu0 0.0
      %1012 = vmatmul.mubr.f32.gmra.mrb[0].mxu0 %v875
      %v1013 = vpop.f32.mrb[0].mxu0
      %v1014 = vadd.f32 %v921, %v1013
      %v1015 = vpop.f32.mrb[0].mxu0
      %1016 = vmatprep.mubr.f32.mxu0 0.0
      %1017 = vmatmul.mubr.f32.gmra.mrb[0].mxu0 %v876
      %v1018 = vpop.f32.mrb[0].mxu0
      %v1019 = vadd.f32 %v921, %v1018
      %v1020 = vpop.f32.mrb[0].mxu0
      %1021 = vmatprep.mubr.f32.mxu0 0.0
      %1022 = vmatmul.mubr.f32.gmra.mrb[0].mxu0 %v877
      %v1023 = vpop.f32.mrb[0].mxu0
      %v1024 = vadd.f32 %v921, %v1023
      %v1025 = vpop.f32.mrb[0].mxu0
      %1026 = vmatprep.mubr.f32.mxu0 0.0
      %1027 = vmatmul.mubr.f32.gmra.mrb[0].mxu0 %v878
      %v1028 = vpop.f32.mrb[0].mxu0
      %v1029 = vadd.f32 %v921, %v1028
      %v1030 = vpop.f32.mrb[0].mxu0
      %1031 = vmatprep.mubr.f32.mxu0 0.0
      %1032 = vmatmul.mubr.f32.gmra.mrb[0].mxu0 %v879
      %v1033 = vpop.f32.mrb[0].mxu0
      %v1034 = vadd.f32 %v921, %v1033
      %v1035 = vpop.f32.mrb[0].mxu0
      %1036 = vmatprep.mubr.f32.mxu0 0.0
      %1037 = vmatmul.mubr.f32.gmra.mrb[0].mxu0 %v880
      %v1038 = vpop.f32.mrb[0].mxu0
      %v1039 = vadd.f32 %v921, %v1038
      %v1040 = vpop.f32.mrb[0].mxu0
      %1041 = vmatprep.mubr.f32.mxu0 0.0
      %1042 = vmatmul.mubr.f32.gmra.mrb[0].mxu0 %v881
      %v1043 = vpop.f32.mrb[0].mxu0
      %v1044 = vadd.f32 %v921, %v1043
      %v1045 = vpop.f32.mrb[0].mxu0
      %1046 = vmatprep.mubr.f32.mxu0 0.0
      %1047 = vmatmul.mubr.f32.gmra.mrb[0].mxu0 %v882
      %v1048 = vpop.f32.mrb[0].mxu0
      %v1049 = vadd.f32 %v921, %v1048
      %v1050 = vpop.f32.mrb[0].mxu0
      %1051 = vmatprep.mubr.f32.mxu0 0.0
      %1052 = vmatmul.mubr.f32.gmra.mrb[0].mxu0 %v883
      %v1053 = vpop.f32.mrb[0].mxu0
      %v1054 = vadd.f32 %v921, %v1053
      %v1055 = vpop.f32.mrb[0].mxu0
      %1056 = vmatprep.mubr.f32.mxu0 0.0
      %1057 = vmatmul.mubr.f32.gmra.mrb[0].mxu0 %v884
      %v1058 = vpop.f32.mrb[0].mxu0
      %v1059 = vadd.f32 %v921, %v1058
      %v1060 = vpop.f32.mrb[0].mxu0
      %1061 = vmatprep.mubr.f32.mxu0 0.0
      %1062 = vmatmul.mubr.f32.gmra.mrb[0].mxu0 %v885
      %v1063 = vpop.f32.mrb[0].mxu0
      %v1064 = vadd.f32 %v921, %v1063
      %v1065 = vpop.f32.mrb[0].mxu0
      %1066 = vmatprep.mubr.f32.mxu0 0.0
      %1067 = vmatmul.mubr.f32.gmra.mrb[0].mxu0 %v886
      %v1068 = vpop.f32.mrb[0].mxu0
      %v1069 = vadd.f32 %v921, %v1068
      %v1070 = vpop.f32.mrb[0].mxu0
      %1071 = vmatprep.mubr.f32.mxu0 0.0
      %1072 = vmatmul.mubr.f32.gmra.mrb[0].mxu0 %v887
      %v1073 = vpop.f32.mrb[0].mxu0
      %v1074 = vadd.f32 %v921, %v1073
      %v1075 = vpop.f32.mrb[0].mxu0
      %1076 = vmatprep.mubr.f32.mxu0 0.0
      %1077 = vmatmul.mubr.f32.gmra.mrb[0].mxu0 %v888
      %v1078 = vpop.f32.mrb[0].mxu0
      %v1079 = vadd.f32 %v921, %v1078
      %v1080 = vpop.f32.mrb[0].mxu0
      %1081 = vmatprep.mubr.f32.mxu0 0.0
      %1082 = vmatmul.mubr.f32.gmra.mrb[0].mxu0 %v889
      %v1083 = vpop.f32.mrb[0].mxu0
      %v1084 = vadd.f32 %v921, %v1083
      %v1085 = vpop.f32.mrb[0].mxu0
      %1086 = vmatprep.mubr.f32.mxu0 0.0
      %1087 = vmatmul.mubr.f32.gmra.mrb[0].mxu0 %v890
      %v1088 = vpop.f32.mrb[0].mxu0
      %v1089 = vadd.f32 %v921, %v1088
      %v1090 = vpop.f32.mrb[0].mxu0
      %1091 = vmatprep.mubr.f32.mxu0 0.0
      %1092 = vmatmul.mubr.f32.gmra.mrb[0].mxu0 %v891
      %v1093 = vpop.f32.mrb[0].mxu0
      %v1094 = vadd.f32 %v921, %v1093
      %v1095 = vpop.f32.mrb[0].mxu0
      %1096 = vmatprep.mubr.f32.mxu0 0.0
      %1097 = vmatmul.mubr.f32.gmra.mrb[0].mxu0 %v892
      %v1098 = vpop.f32.mrb[0].mxu0
      %v1099 = vadd.f32 %v921, %v1098
      %v1100 = vpop.f32.mrb[0].mxu0
      %1101 = vmatprep.mubr.f32.mxu0 0.0
      %1102 = vmatmul.mubr.f32.gmra.mrb[0].mxu0 %v893
      %v1103 = vpop.f32.mrb[0].mxu0
      %v1104 = vadd.f32 %v921, %v1103
      %v1105 = vpop.f32.mrb[0].mxu0
      %1106 = vmatprep.mubr.f32.mxu0 0.0
      %1107 = vmatmul.mubr.f32.gmra.mrb[0].mxu0 %v894
      %v1108 = vpop.f32.mrb[0].mxu0
      %v1109 = vadd.f32 %v921, %v1108
      %v1110 = vpop.f32.mrb[0].mxu0
      %1111 = vmatprep.mubr.f32.mxu0 0.0
      %1112 = vmatmul.mubr.f32.gmra.mrb[0].mxu0 %v895
      %v1113 = vpop.f32.mrb[0].mxu0
      %v1114 = vadd.f32 %v921, %v1113
      %v1115 = vpop.f32.mrb[0].mxu0
      %1116 = vmatprep.mubr.f32.mxu0 0.0
      %1117 = vmatmul.mubr.f32.gmra.mrb[0].mxu0 %v896
      %v1118 = vpop.f32.mrb[0].mxu0
      %v1119 = vadd.f32 %v921, %v1118
      %v1120 = vpop.f32.mrb[0].mxu0
      %1121 = vmatprep.mubr.f32.mxu0 0.0
      %1122 = vmatmul.mubr.f32.gmra.mrb[0].mxu0 %v897
      %v1123 = vpop.f32.mrb[0].mxu0
      %v1124 = vadd.f32 %v921, %v1123
      %v1125 = vpop.f32.mrb[0].mxu0
      %1126 = vmatprep.mubr.f32.mxu0 0.0
      %1127 = vmatmul.mubr.f32.gmra.mrb[0].mxu0 %v898
      %v1128 = vpop.f32.mrb[0].mxu0
      %v1129 = vadd.f32 %v921, %v1128
      %v1130 = vpop.f32.mrb[0].mxu0
      %1131 = vmatprep.mubr.f32.mxu0 0.0
      %1132 = vmatmul.mubr.f32.gmra.mrb[0].mxu0 %v899
      %v1133 = vpop.f32.mrb[0].mxu0
      %v1134 = vadd.f32 %v921, %v1133
      %v1135 = vpop.f32.mrb[0].mxu0
      %1136 = vmatprep.mubr.f32.mxu0 0.0
      %1137 = vmatmul.mubr.f32.gmra.mrb[0].mxu0 %v900
      %v1138 = vpop.f32.mrb[0].mxu0
      %v1139 = vadd.f32 %v921, %v1138
      %v1140 = vpop.f32.mrb[0].mxu0
      %1141 = vmatprep.mubr.f32.mxu0 0.0
      %1142 = vmatmul.mubr.f32.gmra.mrb[0].mxu0 %v901
      %v1143 = vpop.f32.mrb[0].mxu0
      %v1144 = vadd.f32 %v921, %v1143
      %v1145 = vpop.f32.mrb[0].mxu0
      %1146 = vdwg.mxu0
      %v1147 = vrot.slane %v989, 4
      %v1148 = vmax.f32 %v989, %v1147
      %v1149 = vrot.slane %v1148, 2
      %v1150 = vmax.f32 %v1148, %v1149
      %v1151 = vrot.slane %v1150, 1
      %v1152 = vmax.f32 %v1150, %v1151
      %v1153 = vrot.slane %v994, 4
      %v1154 = vmax.f32 %v994, %v1153
      %v1155 = vrot.slane %v1154, 2
      %v1156 = vmax.f32 %v1154, %v1155
      %v1157 = vrot.slane %v1156, 1
      %v1158 = vmax.f32 %v1156, %v1157
      %v1159 = vrot.slane %v999, 4
      %v1160 = vmax.f32 %v999, %v1159
      %v1161 = vrot.slane %v1160, 2
      %v1162 = vmax.f32 %v1160, %v1161
      %v1163 = vrot.slane %v1162, 1
      %v1164 = vmax.f32 %v1162, %v1163
      %v1165 = vrot.slane %v1004, 4
      %v1166 = vmax.f32 %v1004, %v1165
      %v1167 = vrot.slane %v1166, 2
      %v1168 = vmax.f32 %v1166, %v1167
      %v1169 = vrot.slane %v1168, 1
      %v1170 = vmax.f32 %v1168, %v1169
      %v1171 = vrot.slane %v1009, 4
      %v1172 = vmax.f32 %v1009, %v1171
      %v1173 = vrot.slane %v1172, 2
      %v1174 = vmax.f32 %v1172, %v1173
      %v1175 = vrot.slane %v1174, 1
      %v1176 = vmax.f32 %v1174, %v1175
      %v1177 = vrot.slane %v1014, 4
      %v1178 = vmax.f32 %v1014, %v1177
      %v1179 = vrot.slane %v1178, 2
      %v1180 = vmax.f32 %v1178, %v1179
      %v1181 = vrot.slane %v1180, 1
      %v1182 = vmax.f32 %v1180, %v1181
      %v1183 = vrot.slane %v1019, 4
      %v1184 = vmax.f32 %v1019, %v1183
      %v1185 = vrot.slane %v1184, 2
      %v1186 = vmax.f32 %v1184, %v1185
      %v1187 = vrot.slane %v1186, 1
      %v1188 = vmax.f32 %v1186, %v1187
      %v1189 = vrot.slane %v1024, 4
      %v1190 = vmax.f32 %v1024, %v1189
      %v1191 = vrot.slane %v1190, 2
      %v1192 = vmax.f32 %v1190, %v1191
      %v1193 = vrot.slane %v1192, 1
      %v1194 = vmax.f32 %v1192, %v1193
      %v1195 = vrot.slane %v1029, 4
      %v1196 = vmax.f32 %v1029, %v1195
      %v1197 = vrot.slane %v1196, 2
      %v1198 = vmax.f32 %v1196, %v1197
      %v1199 = vrot.slane %v1198, 1
      %v1200 = vmax.f32 %v1198, %v1199
      %v1201 = vrot.slane %v1034, 4
      %v1202 = vmax.f32 %v1034, %v1201
      %v1203 = vrot.slane %v1202, 2
      %v1204 = vmax.f32 %v1202, %v1203
      %v1205 = vrot.slane %v1204, 1
      %v1206 = vmax.f32 %v1204, %v1205
      %v1207 = vrot.slane %v1039, 4
      %v1208 = vmax.f32 %v1039, %v1207
      %v1209 = vrot.slane %v1208, 2
      %v1210 = vmax.f32 %v1208, %v1209
      %v1211 = vrot.slane %v1210, 1
      %v1212 = vmax.f32 %v1210, %v1211
      %v1213 = vrot.slane %v1044, 4
      %v1214 = vmax.f32 %v1044, %v1213
      %v1215 = vrot.slane %v1214, 2
      %v1216 = vmax.f32 %v1214, %v1215
      %v1217 = vrot.slane %v1216, 1
      %v1218 = vmax.f32 %v1216, %v1217
      %v1219 = vrot.slane %v1049, 4
      %v1220 = vmax.f32 %v1049, %v1219
      %v1221 = vrot.slane %v1220, 2
      %v1222 = vmax.f32 %v1220, %v1221
      %v1223 = vrot.slane %v1222, 1
      %v1224 = vmax.f32 %v1222, %v1223
      %v1225 = vrot.slane %v1054, 4
      %v1226 = vmax.f32 %v1054, %v1225
      %v1227 = vrot.slane %v1226, 2
      %v1228 = vmax.f32 %v1226, %v1227
      %v1229 = vrot.slane %v1228, 1
      %v1230 = vmax.f32 %v1228, %v1229
      %v1231 = vrot.slane %v1059, 4
      %v1232 = vmax.f32 %v1059, %v1231
      %v1233 = vrot.slane %v1232, 2
      %v1234 = vmax.f32 %v1232, %v1233
      %v1235 = vrot.slane %v1234, 1
      %v1236 = vmax.f32 %v1234, %v1235
      %v1237 = vrot.slane %v1064, 4
      %v1238 = vmax.f32 %v1064, %v1237
      %v1239 = vrot.slane %v1238, 2
      %v1240 = vmax.f32 %v1238, %v1239
      %v1241 = vrot.slane %v1240, 1
      %v1242 = vmax.f32 %v1240, %v1241
      %v1243 = vrot.slane %v1069, 4
      %v1244 = vmax.f32 %v1069, %v1243
      %v1245 = vrot.slane %v1244, 2
      %v1246 = vmax.f32 %v1244, %v1245
      %v1247 = vrot.slane %v1246, 1
      %v1248 = vmax.f32 %v1246, %v1247
      %v1249 = vrot.slane %v1074, 4
      %v1250 = vmax.f32 %v1074, %v1249
      %v1251 = vrot.slane %v1250, 2
      %v1252 = vmax.f32 %v1250, %v1251
      %v1253 = vrot.slane %v1252, 1
      %v1254 = vmax.f32 %v1252, %v1253
      %v1255 = vrot.slane %v1079, 4
      %v1256 = vmax.f32 %v1079, %v1255
      %v1257 = vrot.slane %v1256, 2
      %v1258 = vmax.f32 %v1256, %v1257
      %v1259 = vrot.slane %v1258, 1
      %v1260 = vmax.f32 %v1258, %v1259
      %v1261 = vrot.slane %v1084, 4
      %v1262 = vmax.f32 %v1084, %v1261
      %v1263 = vrot.slane %v1262, 2
      %v1264 = vmax.f32 %v1262, %v1263
      %v1265 = vrot.slane %v1264, 1
      %v1266 = vmax.f32 %v1264, %v1265
      %v1267 = vrot.slane %v1089, 4
      %v1268 = vmax.f32 %v1089, %v1267
      %v1269 = vrot.slane %v1268, 2
      %v1270 = vmax.f32 %v1268, %v1269
      %v1271 = vrot.slane %v1270, 1
      %v1272 = vmax.f32 %v1270, %v1271
      %v1273 = vrot.slane %v1094, 4
      %v1274 = vmax.f32 %v1094, %v1273
      %v1275 = vrot.slane %v1274, 2
      %v1276 = vmax.f32 %v1274, %v1275
      %v1277 = vrot.slane %v1276, 1
      %v1278 = vmax.f32 %v1276, %v1277
      %v1279 = vrot.slane %v1099, 4
      %v1280 = vmax.f32 %v1099, %v1279
      %v1281 = vrot.slane %v1280, 2
      %v1282 = vmax.f32 %v1280, %v1281
      %v1283 = vrot.slane %v1282, 1
      %v1284 = vmax.f32 %v1282, %v1283
      %v1285 = vrot.slane %v1104, 4
      %v1286 = vmax.f32 %v1104, %v1285
      %v1287 = vrot.slane %v1286, 2
      %v1288 = vmax.f32 %v1286, %v1287
      %v1289 = vrot.slane %v1288, 1
      %v1290 = vmax.f32 %v1288, %v1289
      %v1291 = vrot.slane %v1109, 4
      %v1292 = vmax.f32 %v1109, %v1291
      %v1293 = vrot.slane %v1292, 2
      %v1294 = vmax.f32 %v1292, %v1293
      %v1295 = vrot.slane %v1294, 1
      %v1296 = vmax.f32 %v1294, %v1295
      %v1297 = vrot.slane %v1114, 4
      %v1298 = vmax.f32 %v1114, %v1297
      %v1299 = vrot.slane %v1298, 2
      %v1300 = vmax.f32 %v1298, %v1299
      %v1301 = vrot.slane %v1300, 1
      %v1302 = vmax.f32 %v1300, %v1301
      %v1303 = vrot.slane %v1119, 4
      %v1304 = vmax.f32 %v1119, %v1303
      %v1305 = vrot.slane %v1304, 2
      %v1306 = vmax.f32 %v1304, %v1305
      %v1307 = vrot.slane %v1306, 1
      %v1308 = vmax.f32 %v1306, %v1307
      %v1309 = vrot.slane %v1124, 4
      %v1310 = vmax.f32 %v1124, %v1309
      %v1311 = vrot.slane %v1310, 2
      %v1312 = vmax.f32 %v1310, %v1311
      %v1313 = vrot.slane %v1312, 1
      %v1314 = vmax.f32 %v1312, %v1313
      %v1315 = vrot.slane %v1129, 4
      %v1316 = vmax.f32 %v1129, %v1315
      %v1317 = vrot.slane %v1316, 2
      %v1318 = vmax.f32 %v1316, %v1317
      %v1319 = vrot.slane %v1318, 1
      %v1320 = vmax.f32 %v1318, %v1319
      %v1321 = vrot.slane %v1134, 4
      %v1322 = vmax.f32 %v1134, %v1321
      %v1323 = vrot.slane %v1322, 2
      %v1324 = vmax.f32 %v1322, %v1323
      %v1325 = vrot.slane %v1324, 1
      %v1326 = vmax.f32 %v1324, %v1325
      %v1327 = vrot.slane %v1139, 4
      %v1328 = vmax.f32 %v1139, %v1327
      %v1329 = vrot.slane %v1328, 2
      %v1330 = vmax.f32 %v1328, %v1329
      %v1331 = vrot.slane %v1330, 1
      %v1332 = vmax.f32 %v1330, %v1331
      %v1333 = vrot.slane %v1144, 4
      %v1334 = vmax.f32 %v1144, %v1333
      %v1335 = vrot.slane %v1334, 2
      %v1336 = vmax.f32 %v1334, %v1335
      %v1337 = vrot.slane %v1336, 1
      %v1338 = vmax.f32 %v1336, %v1337
      %v1339 = vsub.f32 %v989, %v1152
      %v1340 = vsub.f32 %v994, %v1158
      %v1341 = vsub.f32 %v999, %v1164
      %v1342 = vsub.f32 %v1004, %v1170
      %v1343 = vsub.f32 %v1009, %v1176
      %v1344 = vsub.f32 %v1014, %v1182
      %v1345 = vsub.f32 %v1019, %v1188
      %v1346 = vsub.f32 %v1024, %v1194
      %v1347 = vsub.f32 %v1029, %v1200
      %v1348 = vsub.f32 %v1034, %v1206
      %v1349 = vsub.f32 %v1039, %v1212
      %v1350 = vsub.f32 %v1044, %v1218
      %v1351 = vsub.f32 %v1049, %v1224
      %v1352 = vsub.f32 %v1054, %v1230
      %v1353 = vsub.f32 %v1059, %v1236
      %v1354 = vsub.f32 %v1064, %v1242
      %v1355 = vsub.f32 %v1069, %v1248
      %v1356 = vsub.f32 %v1074, %v1254
      %v1357 = vsub.f32 %v1079, %v1260
      %v1358 = vsub.f32 %v1084, %v1266
      %v1359 = vsub.f32 %v1089, %v1272
      %v1360 = vsub.f32 %v1094, %v1278
      %v1361 = vsub.f32 %v1099, %v1284
      %v1362 = vsub.f32 %v1104, %v1290
      %v1363 = vsub.f32 %v1109, %v1296
      %v1364 = vsub.f32 %v1114, %v1302
      %v1365 = vsub.f32 %v1119, %v1308
      %v1366 = vsub.f32 %v1124, %v1314
      %v1367 = vsub.f32 %v1129, %v1320
      %v1368 = vsub.f32 %v1134, %v1326
      %v1369 = vsub.f32 %v1139, %v1332
      %v1370 = vsub.f32 %v1144, %v1338
      %v1371 = vmul.f32 %v1339, 1.442695
      %v1372 = vpow.pop %v1371
      %v1373 = vmul.f32 %v1340, 1.442695
      %v1374 = vpow.pop %v1373
      %v1375 = vmul.f32 %v1341, 1.442695
      %v1376 = vpow.pop %v1375
      %v1377 = vmul.f32 %v1342, 1.442695
      %v1378 = vpow.pop %v1377
      %v1379 = vmul.f32 %v1343, 1.442695
      %v1380 = vpow.pop %v1379
      %v1381 = vmul.f32 %v1344, 1.442695
      %v1382 = vpow.pop %v1381
      %v1383 = vmul.f32 %v1345, 1.442695
      %v1384 = vpow.pop %v1383
      %v1385 = vmul.f32 %v1346, 1.442695
      %v1386 = vpow.pop %v1385
      %v1387 = vmul.f32 %v1347, 1.442695
      %v1388 = vpow.pop %v1387
      %v1389 = vmul.f32 %v1348, 1.442695
      %v1390 = vpow.pop %v1389
      %v1391 = vmul.f32 %v1349, 1.442695
      %v1392 = vpow.pop %v1391
      %v1393 = vmul.f32 %v1350, 1.442695
      %v1394 = vpow.pop %v1393
      %v1395 = vmul.f32 %v1351, 1.442695
      %v1396 = vpow.pop %v1395
      %v1397 = vmul.f32 %v1352, 1.442695
      %v1398 = vpow.pop %v1397
      %v1399 = vmul.f32 %v1353, 1.442695
      %v1400 = vpow.pop %v1399
      %v1401 = vmul.f32 %v1354, 1.442695
      %v1402 = vpow.pop %v1401
      %v1403 = vmul.f32 %v1355, 1.442695
      %v1404 = vpow.pop %v1403
      %v1405 = vmul.f32 %v1356, 1.442695
      %v1406 = vpow.pop %v1405
      %v1407 = vmul.f32 %v1357, 1.442695
      %v1408 = vpow.pop %v1407
      %v1409 = vmul.f32 %v1358, 1.442695
      %v1410 = vpow.pop %v1409
      %v1411 = vmul.f32 %v1359, 1.442695
      %v1412 = vpow.pop %v1411
      %v1413 = vmul.f32 %v1360, 1.442695
      %v1414 = vpow.pop %v1413
      %v1415 = vmul.f32 %v1361, 1.442695
      %v1416 = vpow.pop %v1415
      %v1417 = vmul.f32 %v1362, 1.442695
      %v1418 = vpow.pop %v1417
      %v1419 = vmul.f32 %v1363, 1.442695
      %v1420 = vpow.pop %v1419
      %v1421 = vmul.f32 %v1364, 1.442695
      %v1422 = vpow.pop %v1421
      %v1423 = vmul.f32 %v1365, 1.442695
      %v1424 = vpow.pop %v1423
      %v1425 = vmul.f32 %v1366, 1.442695
      %v1426 = vpow.pop %v1425
      %v1427 = vmul.f32 %v1367, 1.442695
      %v1428 = vpow.pop %v1427
      %v1429 = vmul.f32 %v1368, 1.442695
      %v1430 = vpow.pop %v1429
      %v1431 = vmul.f32 %v1369, 1.442695
      %v1432 = vpow.pop %v1431
      %v1433 = vmul.f32 %v1370, 1.442695
      %v1434 = vpow.pop %v1433
      %v1435 = vrot.slane %v1372, 4
      %v1436 = vadd.f32 %v1372, %v1435
      %v1437 = vrot.slane %v1436, 2
      %v1438 = vadd.f32 %v1436, %v1437
      %v1439 = vrot.slane %v1438, 1
      %v1440 = vadd.f32 %v1438, %v1439
      %v1441 = vrot.slane %v1374, 4
      %v1442 = vadd.f32 %v1374, %v1441
      %v1443 = vrot.slane %v1442, 2
      %v1444 = vadd.f32 %v1442, %v1443
      %v1445 = vrot.slane %v1444, 1
      %v1446 = vadd.f32 %v1444, %v1445
      %v1447 = vrot.slane %v1376, 4
      %v1448 = vadd.f32 %v1376, %v1447
      %v1449 = vrot.slane %v1448, 2
      %v1450 = vadd.f32 %v1448, %v1449
      %v1451 = vrot.slane %v1450, 1
      %v1452 = vadd.f32 %v1450, %v1451
      %v1453 = vrot.slane %v1378, 4
      %v1454 = vadd.f32 %v1378, %v1453
      %v1455 = vrot.slane %v1454, 2
      %v1456 = vadd.f32 %v1454, %v1455
      %v1457 = vrot.slane %v1456, 1
      %v1458 = vadd.f32 %v1456, %v1457
      %v1459 = vrot.slane %v1380, 4
      %v1460 = vadd.f32 %v1380, %v1459
      %v1461 = vrot.slane %v1460, 2
      %v1462 = vadd.f32 %v1460, %v1461
      %v1463 = vrot.slane %v1462, 1
      %v1464 = vadd.f32 %v1462, %v1463
      %v1465 = vrot.slane %v1382, 4
      %v1466 = vadd.f32 %v1382, %v1465
      %v1467 = vrot.slane %v1466, 2
      %v1468 = vadd.f32 %v1466, %v1467
      %v1469 = vrot.slane %v1468, 1
      %v1470 = vadd.f32 %v1468, %v1469
      %v1471 = vrot.slane %v1384, 4
      %v1472 = vadd.f32 %v1384, %v1471
      %v1473 = vrot.slane %v1472, 2
      %v1474 = vadd.f32 %v1472, %v1473
      %v1475 = vrot.slane %v1474, 1
      %v1476 = vadd.f32 %v1474, %v1475
      %v1477 = vrot.slane %v1386, 4
      %v1478 = vadd.f32 %v1386, %v1477
      %v1479 = vrot.slane %v1478, 2
      %v1480 = vadd.f32 %v1478, %v1479
      %v1481 = vrot.slane %v1480, 1
      %v1482 = vadd.f32 %v1480, %v1481
      %v1483 = vrot.slane %v1388, 4
      %v1484 = vadd.f32 %v1388, %v1483
      %v1485 = vrot.slane %v1484, 2
      %v1486 = vadd.f32 %v1484, %v1485
      %v1487 = vrot.slane %v1486, 1
      %v1488 = vadd.f32 %v1486, %v1487
      %v1489 = vrot.slane %v1390, 4
      %v1490 = vadd.f32 %v1390, %v1489
      %v1491 = vrot.slane %v1490, 2
      %v1492 = vadd.f32 %v1490, %v1491
      %v1493 = vrot.slane %v1492, 1
      %v1494 = vadd.f32 %v1492, %v1493
      %v1495 = vrot.slane %v1392, 4
      %v1496 = vadd.f32 %v1392, %v1495
      %v1497 = vrot.slane %v1496, 2
      %v1498 = vadd.f32 %v1496, %v1497
      %v1499 = vrot.slane %v1498, 1
      %v1500 = vadd.f32 %v1498, %v1499
      %v1501 = vrot.slane %v1394, 4
      %v1502 = vadd.f32 %v1394, %v1501
      %v1503 = vrot.slane %v1502, 2
      %v1504 = vadd.f32 %v1502, %v1503
      %v1505 = vrot.slane %v1504, 1
      %v1506 = vadd.f32 %v1504, %v1505
      %v1507 = vrot.slane %v1396, 4
      %v1508 = vadd.f32 %v1396, %v1507
      %v1509 = vrot.slane %v1508, 2
      %v1510 = vadd.f32 %v1508, %v1509
      %v1511 = vrot.slane %v1510, 1
      %v1512 = vadd.f32 %v1510, %v1511
      %v1513 = vrot.slane %v1398, 4
      %v1514 = vadd.f32 %v1398, %v1513
      %v1515 = vrot.slane %v1514, 2
      %v1516 = vadd.f32 %v1514, %v1515
      %v1517 = vrot.slane %v1516, 1
      %v1518 = vadd.f32 %v1516, %v1517
      %v1519 = vrot.slane %v1400, 4
      %v1520 = vadd.f32 %v1400, %v1519
      %v1521 = vrot.slane %v1520, 2
      %v1522 = vadd.f32 %v1520, %v1521
      %v1523 = vrot.slane %v1522, 1
      %v1524 = vadd.f32 %v1522, %v1523
      %v1525 = vrot.slane %v1402, 4
      %v1526 = vadd.f32 %v1402, %v1525
      %v1527 = vrot.slane %v1526, 2
      %v1528 = vadd.f32 %v1526, %v1527
      %v1529 = vrot.slane %v1528, 1
      %v1530 = vadd.f32 %v1528, %v1529
      %v1531 = vrot.slane %v1404, 4
      %v1532 = vadd.f32 %v1404, %v1531
      %v1533 = vrot.slane %v1532, 2
      %v1534 = vadd.f32 %v1532, %v1533
      %v1535 = vrot.slane %v1534, 1
      %v1536 = vadd.f32 %v1534, %v1535
      %v1537 = vrot.slane %v1406, 4
      %v1538 = vadd.f32 %v1406, %v1537
      %v1539 = vrot.slane %v1538, 2
      %v1540 = vadd.f32 %v1538, %v1539
      %v1541 = vrot.slane %v1540, 1
      %v1542 = vadd.f32 %v1540, %v1541
      %v1543 = vrot.slane %v1408, 4
      %v1544 = vadd.f32 %v1408, %v1543
      %v1545 = vrot.slane %v1544, 2
      %v1546 = vadd.f32 %v1544, %v1545
      %v1547 = vrot.slane %v1546, 1
      %v1548 = vadd.f32 %v1546, %v1547
      %v1549 = vrot.slane %v1410, 4
      %v1550 = vadd.f32 %v1410, %v1549
      %v1551 = vrot.slane %v1550, 2
      %v1552 = vadd.f32 %v1550, %v1551
      %v1553 = vrot.slane %v1552, 1
      %v1554 = vadd.f32 %v1552, %v1553
      %v1555 = vrot.slane %v1412, 4
      %v1556 = vadd.f32 %v1412, %v1555
      %v1557 = vrot.slane %v1556, 2
      %v1558 = vadd.f32 %v1556, %v1557
      %v1559 = vrot.slane %v1558, 1
      %v1560 = vadd.f32 %v1558, %v1559
      %v1561 = vrot.slane %v1414, 4
      %v1562 = vadd.f32 %v1414, %v1561
      %v1563 = vrot.slane %v1562, 2
      %v1564 = vadd.f32 %v1562, %v1563
      %v1565 = vrot.slane %v1564, 1
      %v1566 = vadd.f32 %v1564, %v1565
      %v1567 = vrot.slane %v1416, 4
      %v1568 = vadd.f32 %v1416, %v1567
      %v1569 = vrot.slane %v1568, 2
      %v1570 = vadd.f32 %v1568, %v1569
      %v1571 = vrot.slane %v1570, 1
      %v1572 = vadd.f32 %v1570, %v1571
      %v1573 = vrot.slane %v1418, 4
      %v1574 = vadd.f32 %v1418, %v1573
      %v1575 = vrot.slane %v1574, 2
      %v1576 = vadd.f32 %v1574, %v1575
      %v1577 = vrot.slane %v1576, 1
      %v1578 = vadd.f32 %v1576, %v1577
      %v1579 = vrot.slane %v1420, 4
      %v1580 = vadd.f32 %v1420, %v1579
      %v1581 = vrot.slane %v1580, 2
      %v1582 = vadd.f32 %v1580, %v1581
      %v1583 = vrot.slane %v1582, 1
      %v1584 = vadd.f32 %v1582, %v1583
      %v1585 = vrot.slane %v1422, 4
      %v1586 = vadd.f32 %v1422, %v1585
      %v1587 = vrot.slane %v1586, 2
      %v1588 = vadd.f32 %v1586, %v1587
      %v1589 = vrot.slane %v1588, 1
      %v1590 = vadd.f32 %v1588, %v1589
      %v1591 = vrot.slane %v1424, 4
      %v1592 = vadd.f32 %v1424, %v1591
      %v1593 = vrot.slane %v1592, 2
      %v1594 = vadd.f32 %v1592, %v1593
      %v1595 = vrot.slane %v1594, 1
      %v1596 = vadd.f32 %v1594, %v1595
      %v1597 = vrot.slane %v1426, 4
      %v1598 = vadd.f32 %v1426, %v1597
      %v1599 = vrot.slane %v1598, 2
      %v1600 = vadd.f32 %v1598, %v1599
      %v1601 = vrot.slane %v1600, 1
      %v1602 = vadd.f32 %v1600, %v1601
      %v1603 = vrot.slane %v1428, 4
      %v1604 = vadd.f32 %v1428, %v1603
      %v1605 = vrot.slane %v1604, 2
      %v1606 = vadd.f32 %v1604, %v1605
      %v1607 = vrot.slane %v1606, 1
      %v1608 = vadd.f32 %v1606, %v1607
      %v1609 = vrot.slane %v1430, 4
      %v1610 = vadd.f32 %v1430, %v1609
      %v1611 = vrot.slane %v1610, 2
      %v1612 = vadd.f32 %v1610, %v1611
      %v1613 = vrot.slane %v1612, 1
      %v1614 = vadd.f32 %v1612, %v1613
      %v1615 = vrot.slane %v1432, 4
      %v1616 = vadd.f32 %v1432, %v1615
      %v1617 = vrot.slane %v1616, 2
      %v1618 = vadd.f32 %v1616, %v1617
      %v1619 = vrot.slane %v1618, 1
      %v1620 = vadd.f32 %v1618, %v1619
      %v1621 = vrot.slane %v1434, 4
      %v1622 = vadd.f32 %v1434, %v1621
      %v1623 = vrot.slane %v1622, 2
      %v1624 = vadd.f32 %v1622, %v1623
      %v1625 = vrot.slane %v1624, 1
      %v1626 = vadd.f32 %v1624, %v1625
      %v1627 = vrcp.pop %v1440
      %v1628 = vrcp.pop %v1446
      %v1629 = vrcp.pop %v1452
      %v1630 = vrcp.pop %v1458
      %v1631 = vrcp.pop %v1464
      %v1632 = vrcp.pop %v1470
      %v1633 = vrcp.pop %v1476
      %v1634 = vrcp.pop %v1482
      %v1635 = vrcp.pop %v1488
      %v1636 = vrcp.pop %v1494
      %v1637 = vrcp.pop %v1500
      %v1638 = vrcp.pop %v1506
      %v1639 = vrcp.pop %v1512
      %v1640 = vrcp.pop %v1518
      %v1641 = vrcp.pop %v1524
      %v1642 = vrcp.pop %v1530
      %v1643 = vrcp.pop %v1536
      %v1644 = vrcp.pop %v1542
      %v1645 = vrcp.pop %v1548
      %v1646 = vrcp.pop %v1554
      %v1647 = vrcp.pop %v1560
      %v1648 = vrcp.pop %v1566
      %v1649 = vrcp.pop %v1572
      %v1650 = vrcp.pop %v1578
      %v1651 = vrcp.pop %v1584
      %v1652 = vrcp.pop %v1590
      %v1653 = vrcp.pop %v1596
      %v1654 = vrcp.pop %v1602
      %v1655 = vrcp.pop %v1608
      %v1656 = vrcp.pop %v1614
      %v1657 = vrcp.pop %v1620
      %v1658 = vrcp.pop %v1626
      %v1659 = vmul.f32 %v1372, %v1627
      %v1660 = vmul.f32 %v1374, %v1628
      %v1661 = vmul.f32 %v1376, %v1629
      %v1662 = vmul.f32 %v1378, %v1630
      %v1663 = vmul.f32 %v1380, %v1631
      %v1664 = vmul.f32 %v1382, %v1632
      %v1665 = vmul.f32 %v1384, %v1633
      %v1666 = vmul.f32 %v1386, %v1634
      %v1667 = vmul.f32 %v1388, %v1635
      %v1668 = vmul.f32 %v1390, %v1636
      %v1669 = vmul.f32 %v1392, %v1637
      %v1670 = vmul.f32 %v1394, %v1638
      %v1671 = vmul.f32 %v1396, %v1639
      %v1672 = vmul.f32 %v1398, %v1640
      %v1673 = vmul.f32 %v1400, %v1641
      %v1674 = vmul.f32 %v1402, %v1642
      %v1675 = vmul.f32 %v1404, %v1643
      %v1676 = vmul.f32 %v1406, %v1644
      %v1677 = vmul.f32 %v1408, %v1645
      %v1678 = vmul.f32 %v1410, %v1646
      %v1679 = vmul.f32 %v1412, %v1647
      %v1680 = vmul.f32 %v1414, %v1648
      %v1681 = vmul.f32 %v1416, %v1649
      %v1682 = vmul.f32 %v1418, %v1650
      %v1683 = vmul.f32 %v1420, %v1651
      %v1684 = vmul.f32 %v1422, %v1652
      %v1685 = vmul.f32 %v1424, %v1653
      %v1686 = vmul.f32 %v1426, %v1654
      %v1687 = vmul.f32 %v1428, %v1655
      %v1688 = vmul.f32 %v1430, %v1656
      %v1689 = vmul.f32 %v1432, %v1657
      %v1690 = vmul.f32 %v1434, %v1658
      %1691 = vst [vmem:[%s226] sm:$0xff] %v1659
      %1692 = vst [vmem:[%s226 + $0x8] sm:$0xff] %v1660
      %1693 = vst [vmem:[%s226 + $0x10] sm:$0xff] %v1661
      %1694 = vst [vmem:[%s226 + $0x18] sm:$0xff] %v1662
      %1695 = vst [vmem:[%s226 + $0x20] sm:$0xff] %v1663
      %1696 = vst [vmem:[%s226 + $0x28] sm:$0xff] %v1664
      %1697 = vst [vmem:[%s226 + $0x30] sm:$0xff] %v1665
      %1698 = vst [vmem:[%s226 + $0x38] sm:$0xff] %v1666
      %1699 = vst [vmem:[%s226 + $0x40] sm:$0xff] %v1667
      %1700 = vst [vmem:[%s226 + $0x48] sm:$0xff] %v1668
      %1701 = vst [vmem:[%s226 + $0x50] sm:$0xff] %v1669
      %1702 = vst [vmem:[%s226 + $0x58] sm:$0xff] %v1670
      %1703 = vst [vmem:[%s226 + $0x60] sm:$0xff] %v1671
      %1704 = vst [vmem:[%s226 + $0x68] sm:$0xff] %v1672
      %1705 = vst [vmem:[%s226 + $0x70] sm:$0xff] %v1673
      %1706 = vst [vmem:[%s226 + $0x78] sm:$0xff] %v1674
      %1707 = vst [vmem:[%s226 + $0x80] sm:$0xff] %v1675
      %1708 = vst [vmem:[%s226 + $0x88] sm:$0xff] %v1676
      %1709 = vst [vmem:[%s226 + $0x90] sm:$0xff] %v1677
      %1710 = vst [vmem:[%s226 + $0x98] sm:$0xff] %v1678
      %1711 = vst [vmem:[%s226 + $0xa0] sm:$0xff] %v1679
      %1712 = vst [vmem:[%s226 + $0xa8] sm:$0xff] %v1680
      %1713 = vst [vmem:[%s226 + $0xb0] sm:$0xff] %v1681
      %1714 = vst [vmem:[%s226 + $0xb8] sm:$0xff] %v1682
      %1715 = vst [vmem:[%s226 + $0xc0] sm:$0xff] %v1683
      %1716 = vst [vmem:[%s226 + $0xc8] sm:$0xff] %v1684
      %1717 = vst [vmem:[%s226 + $0xd0] sm:$0xff] %v1685
      %1718 = vst [vmem:[%s226 + $0xd8] sm:$0xff] %v1686
      %1719 = vst [vmem:[%s226 + $0xe0] sm:$0xff] %v1687
      %1720 = vst [vmem:[%s226 + $0xe8] sm:$0xff] %v1688
      %1721 = vst [vmem:[%s226 + $0xf0] sm:$0xff] %v1689
      %1722 = vst [vmem:[%s226 + $0xf8] sm:$0xff] %v1690
      %s1723 = smul.u32 32, %s16
      %p1724 = scmp.lt.s32.totalorder %s1723, 63
      %s1725 = scalar_select %p1724, %s1723, 63
      %s1726 = smul.addr %s1725, 8
      %s1727 = scalar_lea.vmem %s5, %s1726
      // Predicated region
      $region41: #{net_forward_batched.1} parent=39 // pred_check
        %p1728 = pneg %p144
      $region42: #{net_forward_batched.1} parent=39 // pred_check_branch
        %1730 = sbr.rel (%p1728) target = $region44
      $region43: #{net_forward_batched.1} parent=39 // pred_region
        %s1731 = smul.u32 32, %s16
      $region44: #{net_forward_batched.1} parent=39 // pred_fallthru
        _
    $region40: #{net_forward_batched.1} parent=5 // pred_fallthru
      _
    %p1732 = scmp.le.s32.totalorder 2, %s11
    // Predicated region
    $region45: #{net_forward_batched.1} parent=5 // pred_check
      %p1733 = pneg %p1732
    $region46: #{net_forward_batched.1} parent=5 // pred_check_branch
      %1735 = sbr.rel (%p1733) target = $region48
    $region47: #{net_forward_batched.1} parent=5 // pred_region
      %s1736 = ssub.s32 %s11, 2
      // Predicated region
      $region49: #{net_forward_batched.1} parent=47 // pred_check
        %p1737 = pneg %p150
      $region50: #{net_forward_batched.1} parent=47 // pred_check_branch
        %1739 = sbr.rel (%p1737) target = $region52
      $region51: #{net_forward_batched.1} parent=47 // pred_region
        %s1740 = smul.u32 32, %s17
        %p1741 = scmp.lt.s32.totalorder %s1740, 63
        %s1742 = scalar_select %p1741, %s1740, 63
        %s1743 = smul.addr %s1742, 8
        %s1744 = scalar_lea.vmem %s5, %s1743
      $region52: #{net_forward_batched.1} parent=47 // pred_fallthru
        _
    $region48: #{net_forward_batched.1} parent=5 // pred_fallthru
      _
  $region6: #{net_forward_batched.1} parent=0 // loop_footer
    %s15 = sadd.s32 1, %s11
  $region7: #{net_forward_batched.1} parent=0 // loop_footer_branch
    %10 = sbr.rel target = $region3
  $region8: #{net_forward_batched.1} parent=0 // loop_exit
    _

</llo_original>
